<compile_context>
chip_gen: v6e
topology: v6e:2x2x1
jax: 0.10.0
libtpu: 0.0.40
codegen_flags: <defaults>
</compile_context>

<pallas_src>
import functools

import jax
import jax.numpy as jnp
import numpy as np
from jax.experimental import pallas as pl
from jax.experimental.pallas import tpu as pltpu


# ----------------------------------------------------------------------------
# Hardware-aware tile selection
# ----------------------------------------------------------------------------
def _vmem_capacity_bytes():
    try:
        return int(pltpu.get_tpu_info().vmem_capacity_bytes)
    except Exception:
        return 64 << 20  # conservative: v7x per-TensorCore VMEM


def _vmem_estimate(bm, bi, H, I, out_itemsize):
    """Double-buffered tiles + f32 accumulator + headroom."""
    return (2 * bm * H * 2                 # x tile (bf16) x2 buffers
            + 2 * H * (2 * bi) * 2         # fused [gate|up] weight chunk x2
            + 2 * bi * H * 2               # down weight chunk x2
            + 2 * bm * H * out_itemsize    # output tile x2
            + (bm * H * 4 if bi != I else 0)   # f32 accumulator (num_k > 1 only)
            + (4 << 20))                   # headroom


def choose_tiles(T, H, I, *, out_itemsize=4, block_m=None, block_i=None):
    """Pick (block_m, block_i) that fit the current TPU generation's VMEM."""
    cap = _vmem_capacity_bytes()
    budget = max(cap - (8 << 20), 16 << 20)

    bm = 512 if block_m is None else int(block_m)
    bm = max(8, bm + (-bm) % 8)
    bm = min(bm, max(8, T + (-T) % 8))     # no point tiling beyond the token count

    cands = [d for d in range(128, I + 1, 128) if I % d == 0][::-1]
    if not cands:
        cands = [I]   # TODO(synk): pad I to a multiple of 128 instead of bi=I fallback.
    if block_i is not None and block_i in cands:
        cands = [c for c in cands if c <= block_i]

    while True:
        fits = [c for c in cands if _vmem_estimate(bm, c, H, I, out_itemsize) <= budget]
        if fits:
            return bm, fits[0]
        if bm > 128:
            bm = max(128, bm // 2)
        else:
            return bm, cands[-1]


# ----------------------------------------------------------------------------
# One-time weight preparation (do this OUTSIDE the hot path)
# ----------------------------------------------------------------------------
def prepare_grouped_swiglu_weights(w_gate, w_up, w_down, *, block_i):
    """Cast to bf16 and interleave gate/up per block_i chunk: (G, H, 2*I)."""
    G, H, I = w_gate.shape
    assert w_up.shape == (G, H, I) and w_down.shape == (G, I, H)
    assert I % block_i == 0
    nk = I // block_i
    wg = w_gate.astype(jnp.bfloat16).reshape(G, H, nk, block_i)
    wu = w_up.astype(jnp.bfloat16).reshape(G, H, nk, block_i)
    w_gu = jnp.concatenate([wg, wu], axis=-1).reshape(G, H, 2 * I)
    return w_gu, w_down.astype(jnp.bfloat16)


# ----------------------------------------------------------------------------
# Kernel
# ----------------------------------------------------------------------------
def _grouped_swiglu_kernel(
    # scalar-prefetch (SMEM): per-visit metadata
    vg_ref, vt_ref, lo_ref, hi_ref, dup_ref, first_ref,
    # inputs (VMEM tiles)
    x_ref,        # (BM, H)       bf16
    wgu_ref,      # (H, 2*BI)     bf16   [gate_k | up_k]
    wd_ref,       # (BI, H)       bf16
    # output
    o_ref,        # (BM, H)
    # scratch (only when num_k > 1)
    *scratch,
    num_k, block_i, tile_aligned,
):
    del vt_ref            # only consumed by the index_maps
    v = pl.program_id(0)  # visit = (row-tile x group) intersection
    k = pl.program_id(1)  # chunk of the intermediate dimension I
    is_real = dup_ref[v] == 0   # surplus visits do nothing (and issue no DMAs)

    def compute_chunk():
        x = x_ref[...]                                                  # bf16
        gu = jnp.dot(x, wgu_ref[...], preferred_element_type=jnp.float32)  # (BM, 2*BI)
        gate = gu[:, :block_i]
        up = gu[:, block_i:]
        h = gate * jax.nn.sigmoid(gate) * up                            # SiLU(g)*u, f32
        return jnp.dot(h.astype(x.dtype), wd_ref[...],
                       preferred_element_type=jnp.float32)              # (BM, H) f32

    def write_out(res_f32):
        if tile_aligned:
            # Every tile has exactly one owning group: plain overwrite, no RMW.
            o_ref[...] = res_f32.astype(o_ref.dtype)
        else:
            bm = o_ref.shape[0]
            rows = jax.lax.broadcasted_iota(jnp.int32, (bm, 1), 0)
            mask = (rows >= lo_ref[v]) & (rows < hi_ref[v])
            # Zero-init the block on the tile's first visit so unmasked rows never
            # read uninitialised VMEM; later visits to the same resident block RMW.
            prev = jnp.where(first_ref[v] == 1,
                             jnp.zeros(o_ref.shape, o_ref.dtype), o_ref[...])
            o_ref[...] = jnp.where(mask, res_f32.astype(o_ref.dtype), prev)

    if num_k == 1:
        # Single-I-chunk fast path: no accumulator traffic at all.
        @pl.when(is_real)
        def _():
            write_out(compute_chunk())
    else:
        acc_ref = scratch[0]

        @pl.when(jnp.logical_and(is_real, k == 0))
        def _():
            acc_ref[...] = jnp.zeros_like(acc_ref)

        @pl.when(is_real)
        def _():
            acc_ref[...] += compute_chunk()

        @pl.when(jnp.logical_and(is_real, k == num_k - 1))
        def _():
            write_out(acc_ref[...])


# ----------------------------------------------------------------------------
# Wrapper
# ----------------------------------------------------------------------------
@functools.partial(
    jax.jit, static_argnames=("block_m", "block_i", "tile_aligned", "out_dtype"))
def grouped_swiglu(x, w_gu, w_down, offsets, *, block_m=512, block_i,
                   tile_aligned=False, out_dtype=None):
    """Fused grouped SwiGLU.

    x: (T, H); w_gu: (G, H, 2*I) from prepare_grouped_swiglu_weights(block_i=block_i);
    w_down: (G, I, H) bf16; offsets: (G,) cumulative group ends with offsets[-1] == T.
    tile_aligned=True asserts every offset is a multiple of block_m (enables the
    no-RMW, megacore-parallel fast path).
    """
    T, H = x.shape
    G, Hw, I2 = w_gu.shape
    I = I2 // 2
    assert Hw == H and w_down.shape == (G, I, H)
    assert offsets.shape == (G,)
    # NOTE: offsets[-1] must equal T (same contract as the torch module).

    bm = int(block_m)
    bm += (-bm) % 8
    bi = int(block_i)
    assert I % bi == 0 and (bi % 128 == 0 or bi == I), "invalid block_i for this I"
    num_tiles = -(-T // bm)
    t_pad = num_tiles * bm
    num_k = I // bi
    out_dtype = jnp.dtype(x.dtype) if out_dtype is None else jnp.dtype(out_dtype)

    # Token activations only (weights were cast/concatenated once, outside jit).
    xb = x.astype(jnp.bfloat16)
    if t_pad != T:
        xb = jnp.pad(xb, ((0, t_pad - T), (0, 0)))

    # ---- per-visit metadata (jnp so offsets may be traced) ----
    offsets = offsets.astype(jnp.int32)
    if tile_aligned:
        num_visits = num_tiles
        vis_tile = jnp.arange(num_visits, dtype=jnp.int32)
        row0 = vis_tile * bm
        vis_group = jnp.minimum(
            jnp.searchsorted(offsets, row0, side="right"), G - 1).astype(jnp.int32)
        vis_lo = jnp.zeros((num_visits,), jnp.int32)
        vis_hi = jnp.full((num_visits,), bm, jnp.int32)
        vis_dup = jnp.zeros((num_visits,), jnp.int32)
        vis_first = jnp.ones((num_visits,), jnp.int32)
        visit_sem = "parallel"          # no RMW -> shard visits across TensorCores
    else:
        ends = offsets
        starts = jnp.concatenate([jnp.zeros((1,), jnp.int32), offsets[:-1]])
        sizes = ends - starts
        first_tile = starts // bm
        last_tile = jnp.maximum(ends - 1, starts) // bm
        visits_per_group = jnp.where(sizes > 0, last_tile - first_tile + 1, 0)
        cum_visits = jnp.cumsum(visits_per_group)
        visit_begin = cum_visits - visits_per_group
        total_visits = cum_visits[-1]

        num_visits = num_tiles + G - 1   # static upper bound on tile visits
        vidx = jnp.arange(num_visits, dtype=jnp.int32)
        raw_group = jnp.minimum(
            jnp.searchsorted(cum_visits, vidx, side="right"), G - 1).astype(jnp.int32)
        raw_tile = jnp.clip(first_tile[raw_group] + (vidx - visit_begin[raw_group]),
                            0, num_tiles - 1).astype(jnp.int32)
        dup = vidx >= total_visits
        last_real = jnp.maximum(total_visits - 1, 0)
        # Surplus visits become exact clones of the last real visit: all block
        # indices repeat (no weight/x/out DMA) and compute is gated off via `dup`.
        vis_group = jnp.where(dup, raw_group[last_real], raw_group).astype(jnp.int32)
        vis_tile = jnp.where(dup, raw_tile[last_real], raw_tile).astype(jnp.int32)
        row0 = vis_tile * bm
        vis_lo = jnp.clip(starts[vis_group] - row0, 0, bm).astype(jnp.int32)
        vis_hi = jnp.clip(ends[vis_group] - row0, 0, bm).astype(jnp.int32)
        vis_dup = dup.astype(jnp.int32)
        prev_tile = jnp.concatenate([jnp.full((1,), -1, jnp.int32), vis_tile[:-1]])
        vis_first = (vis_tile != prev_tile).astype(jnp.int32)
        visit_sem = "arbitrary"          # boundary tiles RMW a shared resident block

    # ---- index maps (scalar-prefetch refs are positional trailing args) ----
    def x_map(v, k, vg, vt, lo, hi, dup, first):
        return (vt[v], 0)

    def wgu_map(v, k, vg, vt, lo, hi, dup, first):
        kk = k + dup[v] * (num_k - 1 - k)      # pin k for surplus visits -> no DMA
        return (vg[v], 0, kk)

    def wd_map(v, k, vg, vt, lo, hi, dup, first):
        kk = k + dup[v] * (num_k - 1 - k)
        return (vg[v], kk, 0)

    # ---- generation-aware VMEM budget ----
    cap = _vmem_capacity_bytes()
    est = _vmem_estimate(bm, bi, H, I, out_dtype.itemsize)
    vmem_limit = int(min(max(est, 32 << 20), cap))

    grid_spec = pltpu.PrefetchScalarGridSpec(
        num_scalar_prefetch=6,
        grid=(num_visits, num_k),               # reduction (I-chunk) axis last
        in_specs=[
            pl.BlockSpec((bm, H), x_map),
            pl.BlockSpec((None, H, 2 * bi), wgu_map),
            pl.BlockSpec((None, bi, H), wd_map),
        ],
        out_specs=pl.BlockSpec((bm, H), x_map),
        scratch_shapes=([pltpu.VMEM((bm, H), jnp.float32)] if num_k > 1 else []),
    )

    kernel = functools.partial(_grouped_swiglu_kernel, num_k=num_k, block_i=bi,
                               tile_aligned=tile_aligned)

    out = pl.pallas_call(
        kernel,
        out_shape=jax.ShapeDtypeStruct((t_pad, H), out_dtype),
        grid_spec=grid_spec,
        compiler_params=pltpu.CompilerParams(
            dimension_semantics=(visit_sem, "arbitrary"),
            vmem_limit_bytes=vmem_limit,
        ),
    )(vis_group, vis_tile, vis_lo, vis_hi, vis_dup, vis_first, xb, w_gu, w_down)

    return out[:T] if t_pad != T else out


# ----------------------------------------------------------------------------
# Reference + test
# ----------------------------------------------------------------------------
def _reference(x, w_gate, w_up, w_down, offsets):
    """Group-by-group replica of the torch forward, with matching bf16 matmul dtype."""
    outs = []
    prev = 0
    for g, end in enumerate(np.asarray(offsets)):
        end = int(end)
        xg = x[prev:end].astype(jnp.bfloat16)
        gate = jnp.dot(xg, w_gate[g].astype(jnp.bfloat16),
                       preferred_element_type=jnp.float32)
        up = jnp.dot(xg, w_up[g].astype(jnp.bfloat16),
                     preferred_element_type=jnp.float32)
        h = (gate * jax.nn.sigmoid(gate) * up).astype(jnp.bfloat16)
        outs.append(jnp.dot(h, w_down[g].astype(jnp.bfloat16),
                            preferred_element_type=jnp.float32))
        prev = end
    return jnp.concatenate(outs, axis=0).astype(x.dtype)


if __name__ == "__main__":
    groups = 4
    hidden_size = 128
    intermediate_size = 256
    tokens = 250
    # Non-tile-aligned boundaries, one EMPTY group, ragged token count.
    offsets = jnp.array([72, 72, 200, 250], dtype=jnp.int32)

    key = jax.random.PRNGKey(0)
    kx, kg, ku, kd, kxa = jax.random.split(key, 5)
    x = jax.random.normal(kx, (tokens, hidden_size), dtype=jnp.float32)

    # Deterministic kaiming-uniform-like init (bound = sqrt(6/((1+a^2)*fan_in)), a=sqrt(5)).
    def kaiming_uniform(k, shape, fan_in):
        bound = float(np.sqrt(6.0 / (6.0 * fan_in)))
        return jax.random.uniform(k, shape, jnp.float32, minval=-bound, maxval=bound)

    w_gate = kaiming_uniform(kg, (groups, hidden_size, intermediate_size), hidden_size)
    w_up = kaiming_uniform(ku, (groups, hidden_size, intermediate_size), hidden_size)
    w_down = kaiming_uniform(kd, (groups, intermediate_size, hidden_size),
                             intermediate_size)

    ref = _reference(x, w_gate, w_up, w_down, offsets)

    # --- 1) general ragged path, multiple I-chunks (num_k > 1) + surplus-visit dup path ---
    bm, bi = 128, 128
    w_gu, w_d = prepare_grouped_swiglu_weights(w_gate, w_up, w_down, block_i=bi)
    out = jax.block_until_ready(
        grouped_swiglu(x, w_gu, w_d, offsets, block_m=bm, block_i=bi))
    assert out.shape == (tokens, hidden_size)
    np.testing.assert_allclose(np.asarray(out), np.asarray(ref), rtol=2e-2, atol=2e-2)

    # --- 2) auto tile selection + single-I-chunk fast path (num_k == 1) ---
    bm2, bi2 = choose_tiles(tokens, hidden_size, intermediate_size, out_itemsize=4)
    w_gu2, w_d2 = prepare_grouped_swiglu_weights(w_gate, w_up, w_down, block_i=bi2)
    out2 = jax.block_until_ready(
        grouped_swiglu(x, w_gu2, w_d2, offsets, block_m=bm2, block_i=bi2))
    np.testing.assert_allclose(np.asarray(out2), np.asarray(ref), rtol=2e-2, atol=2e-2)

    # --- 3) tile-aligned fast path (parallel visit axis, no output read-modify-write) ---
    tokens_a = 256
    offsets_a = jnp.array([128, 128, 256, 256], dtype=jnp.int32)  # multiples of block_m
    xa = jax.random.normal(kxa, (tokens_a, hidden_size), dtype=jnp.float32)
    ref_a = _reference(xa, w_gate, w_up, w_down, offsets_a)
    out_a = jax.block_until_ready(
        grouped_swiglu(xa, w_gu, w_d, offsets_a, block_m=128, block_i=128,
                       tile_aligned=True))
    np.testing.assert_allclose(np.asarray(out_a), np.asarray(ref_a), rtol=2e-2, atol=2e-2)

    print("KERNEL_OK")
</pallas_src>

<mosaic_0001>
module attributes {stable_mosaic.version = 11 : i64} {
  func.func @_grouped_swiglu_kernel(%arg0: i32, %arg1: i32, %arg2: memref<5xi32, #tpu.memory_space<smem>>, %arg3: memref<5xi32, #tpu.memory_space<smem>>, %arg4: memref<5xi32, #tpu.memory_space<smem>>, %arg5: memref<5xi32, #tpu.memory_space<smem>>, %arg6: memref<5xi32, #tpu.memory_space<smem>>, %arg7: memref<5xi32, #tpu.memory_space<smem>>, %arg8: memref<128x128xbf16, #tpu.memory_space<vmem>>, %arg9: memref<1x128x256xbf16, #tpu.memory_space<vmem>>, %arg10: memref<1x128x128xbf16, #tpu.memory_space<vmem>>, %arg11: memref<128x128xf32, #tpu.memory_space<vmem>>, %arg12: memref<128x128xf32, #tpu.memory_space<vmem>>) attributes {dimension_semantics = [#tpu.dimension_semantics<arbitrary>, #tpu.dimension_semantics<arbitrary>], iteration_bounds = array<i64: 5, 2>, scalar_prefetch = 6 : i64, scratch_operands = 1 : i64, tpu.core_type = #tpu.core_type<tc>, window_params = [{transform_indices = @transform_0, window_bounds = array<i64: 128, 128>}, {transform_indices = @transform_1, window_bounds = array<i64: 1, 128, 256>}, {transform_indices = @transform_2, window_bounds = array<i64: 1, 128, 128>}, {transform_indices = @transform_3, window_bounds = array<i64: 128, 128>}]} {
    %0 = arith.index_cast %arg0 : i32 to index
    %1 = memref.load %arg6[%0] : memref<5xi32, #tpu.memory_space<smem>>
    %c0_i32 = arith.constant 0 : i32
    %2 = arith.cmpi eq, %1, %c0_i32 : i32
    %c0_i32_0 = arith.constant 0 : i32
    %3 = arith.cmpi eq, %arg1, %c0_i32_0 : i32
    %4 = arith.andi %2, %3 : i1
    %5 = arith.extui %4 : i1 to i32
    %c0_i32_1 = arith.constant 0 : i32
    %6 = arith.cmpi ne, %5, %c0_i32_1 : i32
    scf.if %6 {
      %cst = arith.constant 0.000000e+00 : f32
      %13 = vector.broadcast %cst : f32 to vector<128x128xf32>
      %c0 = arith.constant 0 : index
      %c0_4 = arith.constant 0 : index
      %14 = vector.load %arg12[%c0, %c0_4] : memref<128x128xf32, #tpu.memory_space<vmem>>, vector<128x128xf32>
      tpu.vector_store %arg12[%c0, %c0_4], %13 {strides = array<i32>} : memref<128x128xf32, #tpu.memory_space<vmem>>, vector<128x128xf32>,
    } else {
    }
    %7 = arith.extui %2 : i1 to i32
    %c0_i32_2 = arith.constant 0 : i32
    %8 = arith.cmpi ne, %7, %c0_i32_2 : i32
    scf.if %8 {
      %c0 = arith.constant 0 : index
      %c0_4 = arith.constant 0 : index
      %13 = vector.load %arg12[%c0, %c0_4] : memref<128x128xf32, #tpu.memory_space<vmem>>, vector<128x128xf32>
      %c0_5 = arith.constant 0 : index
      %c0_6 = arith.constant 0 : index
      %14 = vector.load %arg8[%c0_5, %c0_6] : memref<128x128xbf16, #tpu.memory_space<vmem>>, vector<128x128xbf16>
      %c0_7 = arith.constant 0 : index
      %c0_8 = arith.constant 0 : index
      %c0_9 = arith.constant 0 : index
      %15 = vector.load %arg9[%c0_7, %c0_8, %c0_9] : memref<1x128x256xbf16, #tpu.memory_space<vmem>>, vector<1x128x256xbf16>
      %16 = vector.shape_cast %15 : vector<1x128x256xbf16> to vector<128x256xbf16>
      %cst = arith.constant dense<0.000000e+00> : vector<128x256xf32>
      %17 = tpu.matmul %14, %16, %cst {dimension_numbers = #tpu.dot_dimension_numbers<[1], [0], [0], [1], [0, 0, 1, 1], [], []>} : vector<128x128xbf16>, vector<128x256xbf16>, vector<128x256xf32> -> vector<128x256xf32>
      %18 = vector.extract_strided_slice %17 {offsets = [0, 0], sizes = [128, 128], strides = [1, 1]} : vector<128x256xf32> to vector<128x128xf32>
      %19 = vector.extract_strided_slice %17 {offsets = [0, 128], sizes = [128, 128], strides = [1, 1]} : vector<128x256xf32> to vector<128x128xf32>
      %20 = arith.negf %18 : vector<128x128xf32>
      %21 = math.exp %20 : vector<128x128xf32>
      %cst_10 = arith.constant 1.000000e+00 : f32
      %22 = vector.broadcast %cst_10 : f32 to vector<128x128xf32>
      %23 = arith.addf %22, %21 : vector<128x128xf32>
      %24 = arith.divf %22, %23 : vector<128x128xf32>
      %25 = arith.mulf %18, %24 : vector<128x128xf32>
      %26 = arith.mulf %25, %19 : vector<128x128xf32>
      %27 = arith.truncf %26 : vector<128x128xf32> to vector<128x128xbf16>
      %c0_11 = arith.constant 0 : index
      %c0_12 = arith.constant 0 : index
      %c0_13 = arith.constant 0 : index
      %28 = vector.load %arg10[%c0_11, %c0_12, %c0_13] : memref<1x128x128xbf16, #tpu.memory_space<vmem>>, vector<1x128x128xbf16>
      %29 = vector.shape_cast %28 : vector<1x128x128xbf16> to vector<128x128xbf16>
      %cst_14 = arith.constant dense<0.000000e+00> : vector<128x128xf32>
      %30 = tpu.matmul %27, %29, %cst_14 {dimension_numbers = #tpu.dot_dimension_numbers<[1], [0], [0], [1], [0, 0, 1, 1], [], []>} : vector<128x128xbf16>, vector<128x128xbf16>, vector<128x128xf32> -> vector<128x128xf32>
      %31 = arith.addf %13, %30 : vector<128x128xf32>
      %c0_15 = arith.constant 0 : index
      %c0_16 = arith.constant 0 : index
      %32 = vector.load %arg12[%c0_15, %c0_16] : memref<128x128xf32, #tpu.memory_space<vmem>>, vector<128x128xf32>
      tpu.vector_store %arg12[%c0_15, %c0_16], %31 {strides = array<i32>} : memref<128x128xf32, #tpu.memory_space<vmem>>, vector<128x128xf32>,
    } else {
    }
    %c1_i32 = arith.constant 1 : i32
    %9 = arith.cmpi eq, %arg1, %c1_i32 : i32
    %10 = arith.andi %2, %9 : i1
    %11 = arith.extui %10 : i1 to i32
    %c0_i32_3 = arith.constant 0 : i32
    %12 = arith.cmpi ne, %11, %c0_i32_3 : i32
    scf.if %12 {
      %c0 = arith.constant 0 : index
      %c0_4 = arith.constant 0 : index
      %13 = vector.load %arg12[%c0, %c0_4] : memref<128x128xf32, #tpu.memory_space<vmem>>, vector<128x128xf32>
      %14 = tpu.iota {dimensions = array<i32: 0>} : vector<128x1xi32>
      %15 = arith.index_cast %arg0 : i32 to index
      %16 = memref.load %arg4[%15] : memref<5xi32, #tpu.memory_space<smem>>
      %17 = vector.broadcast %16 : i32 to vector<128x1xi32>
      %18 = arith.cmpi sge, %14, %17 : vector<128x1xi32>
      %19 = arith.index_cast %arg0 : i32 to index
      %20 = memref.load %arg5[%19] : memref<5xi32, #tpu.memory_space<smem>>
      %21 = vector.broadcast %20 : i32 to vector<128x1xi32>
      %22 = arith.cmpi slt, %14, %21 : vector<128x1xi32>
      %23 = arith.andi %18, %22 : vector<128x1xi1>
      %24 = arith.index_cast %arg0 : i32 to index
      %25 = memref.load %arg7[%24] : memref<5xi32, #tpu.memory_space<smem>>
      %c1_i32_5 = arith.constant 1 : i32
      %26 = arith.cmpi eq, %25, %c1_i32_5 : i32
      %cst = arith.constant 0.000000e+00 : f32
      %27 = vector.broadcast %cst : f32 to vector<128x128xf32>
      %c0_6 = arith.constant 0 : index
      %c0_7 = arith.constant 0 : index
      %28 = vector.load %arg11[%c0_6, %c0_7] : memref<128x128xf32, #tpu.memory_space<vmem>>, vector<128x128xf32>
      %29 = arith.select %26, %27, %28 : vector<128x128xf32>
      %30 = vector.shape_cast %23 : vector<128x1xi1> to vector<128x1xi1>
      %31 = vector.broadcast %30 : vector<128x1xi1> to vector<128x128xi1>
      %32 = arith.select %31, %13, %29 : vector<128x128xi1>, vector<128x128xf32>
      %c0_8 = arith.constant 0 : index
      %c0_9 = arith.constant 0 : index
      %33 = vector.load %arg11[%c0_8, %c0_9] : memref<128x128xf32, #tpu.memory_space<vmem>>, vector<128x128xf32>
      tpu.vector_store %arg11[%c0_8, %c0_9], %32 {strides = array<i32>} : memref<128x128xf32, #tpu.memory_space<vmem>>, vector<128x128xf32>,
    } else {
    }
    return
  }
  func.func @transform_0(%arg0: i32, %arg1: i32, %arg2: memref<5xi32, #tpu.memory_space<smem>>, %arg3: memref<5xi32, #tpu.memory_space<smem>>, %arg4: memref<5xi32, #tpu.memory_space<smem>>, %arg5: memref<5xi32, #tpu.memory_space<smem>>, %arg6: memref<5xi32, #tpu.memory_space<smem>>, %arg7: memref<5xi32, #tpu.memory_space<smem>>) -> (i32, i32) {
    %0 = arith.index_cast %arg0 : i32 to index
    %1 = memref.load %arg3[%0] : memref<5xi32, #tpu.memory_space<smem>>
    %c0_i32 = arith.constant 0 : i32
    %c0_i32_0 = arith.constant 0 : i32
    return %1, %c0_i32 : i32, i32
  }
  func.func @transform_1(%arg0: i32, %arg1: i32, %arg2: memref<5xi32, #tpu.memory_space<smem>>, %arg3: memref<5xi32, #tpu.memory_space<smem>>, %arg4: memref<5xi32, #tpu.memory_space<smem>>, %arg5: memref<5xi32, #tpu.memory_space<smem>>, %arg6: memref<5xi32, #tpu.memory_space<smem>>, %arg7: memref<5xi32, #tpu.memory_space<smem>>) -> (i32, i32, i32) {
    %0 = arith.index_cast %arg0 : i32 to index
    %1 = memref.load %arg6[%0] : memref<5xi32, #tpu.memory_space<smem>>
    %c1_i32 = arith.constant 1 : i32
    %2 = arith.subi %c1_i32, %arg1 : i32
    %3 = arith.muli %1, %2 : i32
    %4 = arith.addi %arg1, %3 : i32
    %5 = arith.index_cast %arg0 : i32 to index
    %6 = memref.load %arg2[%5] : memref<5xi32, #tpu.memory_space<smem>>
    %c0_i32 = arith.constant 0 : i32
    %c0_i32_0 = arith.constant 0 : i32
    return %6, %c0_i32, %4 : i32, i32, i32
  }
  func.func @transform_2(%arg0: i32, %arg1: i32, %arg2: memref<5xi32, #tpu.memory_space<smem>>, %arg3: memref<5xi32, #tpu.memory_space<smem>>, %arg4: memref<5xi32, #tpu.memory_space<smem>>, %arg5: memref<5xi32, #tpu.memory_space<smem>>, %arg6: memref<5xi32, #tpu.memory_space<smem>>, %arg7: memref<5xi32, #tpu.memory_space<smem>>) -> (i32, i32, i32) {
    %0 = arith.index_cast %arg0 : i32 to index
    %1 = memref.load %arg6[%0] : memref<5xi32, #tpu.memory_space<smem>>
    %c1_i32 = arith.constant 1 : i32
    %2 = arith.subi %c1_i32, %arg1 : i32
    %3 = arith.muli %1, %2 : i32
    %4 = arith.addi %arg1, %3 : i32
    %5 = arith.index_cast %arg0 : i32 to index
    %6 = memref.load %arg2[%5] : memref<5xi32, #tpu.memory_space<smem>>
    %c0_i32 = arith.constant 0 : i32
    %c0_i32_0 = arith.constant 0 : i32
    return %6, %4, %c0_i32 : i32, i32, i32
  }
  func.func @transform_3(%arg0: i32, %arg1: i32, %arg2: memref<5xi32, #tpu.memory_space<smem>>, %arg3: memref<5xi32, #tpu.memory_space<smem>>, %arg4: memref<5xi32, #tpu.memory_space<smem>>, %arg5: memref<5xi32, #tpu.memory_space<smem>>, %arg6: memref<5xi32, #tpu.memory_space<smem>>, %arg7: memref<5xi32, #tpu.memory_space<smem>>) -> (i32, i32) {
    %0 = arith.index_cast %arg0 : i32 to index
    %1 = memref.load %arg3[%0] : memref<5xi32, #tpu.memory_space<smem>>
    %c0_i32 = arith.constant 0 : i32
    %c0_i32_0 = arith.constant 0 : i32
    return %1, %c0_i32 : i32, i32
  }
}

</mosaic_0001>

<llo_original>
// kernel: custom-call.1
$region0: #{custom-call.1}
  %s0 = inlined_call_operand.vmem [shape: u32[5], index: 0, kind: output, shape index: {}]

// kernel: grouped_swiglu.1
$region0: #{grouped_swiglu.1}
  #allocation0 [shape = 'u32[]', space=smem, size = 0x4, offset = 0x4, fixed_abs, tag = 'smem constant byte address 0x4 - core index']
  #allocation1 [shape = 'u32[144,128]{1,0:T(1,128)}', space=vmem, size = 0x12000, scoped, tag = 'internal scratch']
  #allocation2 [shape = 'f32[128,128]{1,0:T(8,128)}', space=vmem, size = 0x10000, scoped, tag = 'scratch operand']
  #allocation3 [shape = 's32[1]{0}', space=sflag, size = 0x4, scoped, tag = 'scoped memory for grouped_swiglu.1']
  #allocation4 [shape = 'u8[512]{0}', space=smem, size = 0x200, scoped, tag = 'prefetched SMEM operand 0']
  #allocation5 [shape = 'u8[512]{0}', space=smem, size = 0x200, scoped, tag = 'prefetched SMEM operand 1']
  #allocation6 [shape = 'u8[512]{0}', space=smem, size = 0x200, scoped, tag = 'prefetched SMEM operand 2']
  #allocation7 [shape = 'u8[512]{0}', space=smem, size = 0x200, scoped, tag = 'prefetched SMEM operand 3']
  #allocation8 [shape = 'u8[512]{0}', space=smem, size = 0x200, scoped, tag = 'prefetched SMEM operand 4']
  #allocation9 [shape = 'u8[512]{0}', space=smem, size = 0x200, scoped, tag = 'prefetched SMEM operand 5']
  %s0 = inlined_call_operand.vmem [shape: s32[5], index: 0, kind: input, shape index: {}]
  %s1 = inlined_call_operand.vmem [shape: s32[5], index: 1, kind: input, shape index: {}]
  %s2 = inlined_call_operand.vmem [shape: s32[5], index: 2, kind: input, shape index: {}]
  %s3 = inlined_call_operand.vmem [shape: s32[5], index: 3, kind: input, shape index: {}]
  %s4 = inlined_call_operand.vmem [shape: s32[5], index: 4, kind: input, shape index: {}]
  %s5 = inlined_call_operand.vmem [shape: s32[5], index: 5, kind: input, shape index: {}]
  %s6 = inlined_call_operand.vmem [shape: bf16[256,128], index: 6, kind: input, shape index: {}]
  %s7 = inlined_call_operand.vmem [shape: bf16[4,128,512], index: 7, kind: input, shape index: {}]
  %s8 = inlined_call_operand.vmem [shape: bf16[4,256,128], index: 8, kind: input, shape index: {}]
  %s9 = inlined_call_operand.hbm [shape: f32[256,128], index: 9, kind: output, shape index: {}]
  %s10 = sld [smem:[#allocation0]]
  $region95: #{grouped_swiglu.1} parent=0
    _
  %s12 = ssub.s32 1, %s10
  %s13 = scalar_select 0, %s12, %s10
  %s14 = sshll.u32 %s0, 4
  %s15 = int_to_ptr.vmem [resolvable:$true] %s14
  %17 = dma.vmem_to_smem %s15, 16, [#allocation4], [#allocation3]
  %s18 = sshll.u32 %s1, 4
  %s19 = int_to_ptr.vmem [resolvable:$true] %s18
  %21 = dma.vmem_to_smem %s19, 16, [#allocation5], [#allocation3]
  %s22 = sshll.u32 %s2, 4
  %s23 = int_to_ptr.vmem [resolvable:$true] %s22
  %25 = dma.vmem_to_smem %s23, 16, [#allocation6], [#allocation3]
  %s26 = sshll.u32 %s3, 4
  %s27 = int_to_ptr.vmem [resolvable:$true] %s26
  %29 = dma.vmem_to_smem %s27, 16, [#allocation7], [#allocation3]
  %s30 = sshll.u32 %s4, 4
  %s31 = int_to_ptr.vmem [resolvable:$true] %s30
  %33 = dma.vmem_to_smem %s31, 16, [#allocation8], [#allocation3]
  %s34 = sshll.u32 %s5, 4
  %s35 = int_to_ptr.vmem [resolvable:$true] %s34
  %37 = dma.vmem_to_smem %s35, 16, [#allocation9], [#allocation3]
  %38 = dma.done [#allocation3], 96
  %39 = sfence
  $region1: #{grouped_swiglu.1} parent=0
    #allocation10 [shape = 'u8[131072]{0}', space=vmem, size = 0x20000, scoped, tag = 'input window, operand 7']
    #allocation11 [shape = 'u8[131072]{0}', space=vmem, size = 0x20000, scoped, tag = 'output window, operand 0']
    #allocation12 [shape = 's32[2]{0}', space=sflag, size = 0x8, scoped, tag = 'scoped memory for grouped_swiglu.1']
    %40 = vsyncpa [#allocation12], 0
    %s41 = scalar_lea.sflag [#allocation12], 1
    %42 = vsyncpa %s41, 0
    loop: start=0, step=1, limit=12
    $region2: #{grouped_swiglu.1} parent=1 // loop_pre_header
      _
    $region3: #{grouped_swiglu.1} parent=1 // loop_header
      %s44 = sphi 0, %s48
      %p45 = scmp.ge.s32.totalorder %s44, 12
      %s51 = sphi 0, %s63
      %s52 = sphi 0, %s59
      %s53 = sphi 0, %s51
      %s54 = sphi 0, %s52
      %s55 = sphi 0, %s53
      %s56 = sphi 0, %s54
      %s68 = sphi 0, %s70
      %s71 = sphi 0, %s68
      %s72 = sphi 0, %s71
      %s88 = sphi 0, %s72
      %s106 = sphi 0, %s108
      %s109 = sphi 0, %s106
      %s110 = sphi 0, %s109
      %s126 = sphi 0, %s110
      %s144 = sphi 0, %s146
      %s147 = sphi 0, %s144
      %s148 = sphi 0, %s147
      %s164 = sphi 0, %s148
      %s172 = sphi 0, %s174
      %s175 = sphi 0, %s172
      %s176 = sphi 0, %s175
      %s192 = sphi 0, %s176
    $region4: #{grouped_swiglu.1} parent=1 // loop_header_branch
      %47 = sbr.rel (%p45) target = $region8
    $region5: #{grouped_swiglu.1} parent=1 // loop_body
      %s49 = ssub.s32 %s44, 1
      %s50 = ssub.s32 %s44, 2
      %s57 = sadd.s32 1, %s52
      %p58 = scmp.ge.s32.totalorder %s57, 2
      %s59 = scalar_select %p58, 0, %s57
      %s60 = sadd.s32 1, %s51
      %s61 = scalar_select %p58, %s60, %s51
      %p62 = scmp.ge.s32.totalorder %s61, 5
      %s63 = scalar_select %p62, 0, %s61
      %s64 = sld [smem:[#allocation5 + %s51]]
      %s65 = sld [smem:[#allocation5 + %s63]]
      %s66 = ssub.s32 %s64, %s65
      %p67 = scmp.eq.s32.totalorder %s66, 0
      %s69 = sadd.s32 %s68, 1
      %s70 = scalar_select %p67, %s68, %s69
      %p73 = pneg %p67
      %p74 = scmp.eq.s32.totalorder %s44, 9
      %p75 = por %p73, %p74
      %p76 = scmp.ne.s32.totalorder %s68, %s71
      %p77 = scmp.eq.s32.totalorder %s44, 0
      %p78 = por %p76, %p77
      %p79 = scmp.ne.s32.totalorder %s68, %s71
      %p80 = scmp.eq.s32.totalorder %s49, 9
      %p81 = por %p79, %p80
      %p82 = scmp.ne.s32.totalorder %s71, %s72
      %p83 = scmp.eq.s32.totalorder %s49, 0
      %p84 = por %p82, %p83
      %p85 = scmp.ne.s32.totalorder %s71, %s72
      %p86 = scmp.eq.s32.totalorder %s50, 9
      %p87 = por %p85, %p86
      %p89 = scmp.ne.s32.totalorder %s72, %s88
      %p90 = scmp.eq.s32.totalorder %s50, 0
      %p91 = por %p89, %p90
      %s92 = sld [smem:[#allocation8 + %s51]]
      %s93 = ssub.s32 1, %s52
      %s94 = smul.u32 %s92, %s93
      %s95 = sadd.s32 %s52, %s94
      %s96 = sld [smem:[#allocation4 + %s51]]
      %s97 = sld [smem:[#allocation8 + %s63]]
      %s98 = ssub.s32 1, %s59
      %s99 = smul.u32 %s97, %s98
      %s100 = sadd.s32 %s59, %s99
      %s101 = sld [smem:[#allocation4 + %s63]]
      %s102 = ssub.s32 %s96, %s101
      %s103 = ssub.s32 %s95, %s100
      %s104 = sor.u32 %s102, %s103
      %p105 = scmp.eq.s32.totalorder %s104, 0
      %s107 = sadd.s32 %s106, 1
      %s108 = scalar_select %p105, %s106, %s107
      %p111 = pneg %p105
      %p112 = scmp.eq.s32.totalorder %s44, 9
      %p113 = por %p111, %p112
      %p114 = scmp.ne.s32.totalorder %s106, %s109
      %p115 = scmp.eq.s32.totalorder %s44, 0
      %p116 = por %p114, %p115
      %p117 = scmp.ne.s32.totalorder %s106, %s109
      %p118 = scmp.eq.s32.totalorder %s49, 9
      %p119 = por %p117, %p118
      %p120 = scmp.ne.s32.totalorder %s109, %s110
      %p121 = scmp.eq.s32.totalorder %s49, 0
      %p122 = por %p120, %p121
      %p123 = scmp.ne.s32.totalorder %s109, %s110
      %p124 = scmp.eq.s32.totalorder %s50, 9
      %p125 = por %p123, %p124
      %p127 = scmp.ne.s32.totalorder %s110, %s126
      %p128 = scmp.eq.s32.totalorder %s50, 0
      %p129 = por %p127, %p128
      %s130 = sld [smem:[#allocation8 + %s51]]
      %s131 = ssub.s32 1, %s52
      %s132 = smul.u32 %s130, %s131
      %s133 = sadd.s32 %s52, %s132
      %s134 = sld [smem:[#allocation4 + %s51]]
      %s135 = sld [smem:[#allocation8 + %s63]]
      %s136 = ssub.s32 1, %s59
      %s137 = smul.u32 %s135, %s136
      %s138 = sadd.s32 %s59, %s137
      %s139 = sld [smem:[#allocation4 + %s63]]
      %s140 = ssub.s32 %s134, %s139
      %s141 = ssub.s32 %s133, %s138
      %s142 = sor.u32 %s140, %s141
      %p143 = scmp.eq.s32.totalorder %s142, 0
      %s145 = sadd.s32 %s144, 1
      %s146 = scalar_select %p143, %s144, %s145
      %p149 = pneg %p143
      %p150 = scmp.eq.s32.totalorder %s44, 9
      %p151 = por %p149, %p150
      %p152 = scmp.ne.s32.totalorder %s144, %s147
      %p153 = scmp.eq.s32.totalorder %s44, 0
      %p154 = por %p152, %p153
      %p155 = scmp.ne.s32.totalorder %s144, %s147
      %p156 = scmp.eq.s32.totalorder %s49, 9
      %p157 = por %p155, %p156
      %p158 = scmp.ne.s32.totalorder %s147, %s148
      %p159 = scmp.eq.s32.totalorder %s49, 0
      %p160 = por %p158, %p159
      %p161 = scmp.ne.s32.totalorder %s147, %s148
      %p162 = scmp.eq.s32.totalorder %s50, 9
      %p163 = por %p161, %p162
      %p165 = scmp.ne.s32.totalorder %s148, %s164
      %p166 = scmp.eq.s32.totalorder %s50, 0
      %p167 = por %p165, %p166
      %s168 = sld [smem:[#allocation5 + %s51]]
      %s169 = sld [smem:[#allocation5 + %s63]]
      %s170 = ssub.s32 %s168, %s169
      %p171 = scmp.eq.s32.totalorder %s170, 0
      %s173 = sadd.s32 %s172, 1
      %s174 = scalar_select %p171, %s172, %s173
      %p177 = pneg %p171
      %p178 = scmp.eq.s32.totalorder %s44, 9
      %p179 = por %p177, %p178
      %p180 = scmp.ne.s32.totalorder %s172, %s175
      %p181 = scmp.eq.s32.totalorder %s44, 0
      %p182 = por %p180, %p181
      %p183 = scmp.ne.s32.totalorder %s172, %s175
      %p184 = scmp.eq.s32.totalorder %s49, 9
      %p185 = por %p183, %p184
      %p186 = scmp.ne.s32.totalorder %s175, %s176
      %p187 = scmp.eq.s32.totalorder %s49, 0
      %p188 = por %p186, %p187
      %p189 = scmp.ne.s32.totalorder %s175, %s176
      %p190 = scmp.eq.s32.totalorder %s50, 9
      %p191 = por %p189, %p190
      %p193 = scmp.ne.s32.totalorder %s176, %s192
      %p194 = scmp.eq.s32.totalorder %s50, 0
      %p195 = por %p193, %p194
      %p196 = scmp.le.s32.totalorder 1, %s44
      %p197 = scmp.lt.s32.totalorder %s44, 11
      %p198 = pnand %p196, %p197
      %p199 = pneg %p198
      // Predicated region
      $region9: #{grouped_swiglu.1} parent=5 // pred_check
        _
      $region10: #{grouped_swiglu.1} parent=5 // pred_check_branch
        %201 = sbr.rel (%p198) target = $region12
      $region11: #{grouped_swiglu.1} parent=5 // pred_region
        %s202 = ssub.s32 %s44, 1
      $region12: #{grouped_swiglu.1} parent=5 // pred_fallthru
        _
      %p203 = scmp.lt.s32.totalorder %s44, 10
      // Predicated region
      $region13: #{grouped_swiglu.1} parent=5 // pred_check
        %p204 = pneg %p203
      $region14: #{grouped_swiglu.1} parent=5 // pred_check_branch
        %206 = sbr.rel (%p204) target = $region16
      $region15: #{grouped_swiglu.1} parent=5 // pred_region
        // Predicated region
        $region17: #{grouped_swiglu.1} parent=15 // pred_check
          %p207 = pneg %p78
        $region18: #{grouped_swiglu.1} parent=15 // pred_check_branch
          %209 = sbr.rel (%p207) target = $region20
        $region19: #{grouped_swiglu.1} parent=15 // pred_region
          %s210 = sld [smem:[#allocation5 + %s51]]
          %s211 = smul.u32 16, %s210
          %p212 = scmp.lt.s32.totalorder %s211, 31
          %s213 = scalar_select %p212, %s211, 31
          %s214 = smul.addr %s213, 4
          %s215 = scalar_lea.vmem %s6, %s214
          %s216 = sld [smem:[#allocation5 + %s51]]
          %s217 = smul.u32 16, %s216
        $region20: #{grouped_swiglu.1} parent=15 // pred_fallthru
          _
        // Predicated region
        $region21: #{grouped_swiglu.1} parent=15 // pred_check
          %p218 = pneg %p116
        $region22: #{grouped_swiglu.1} parent=15 // pred_check_branch
          %220 = sbr.rel (%p218) target = $region24
        $region23: #{grouped_swiglu.1} parent=15 // pred_region
          %s221 = sand.u32 %s106, 1
          %s222 = sand.u32 %s106, 1
          %s223 = smul.addr %s222, 128
          %s224 = scalar_lea.vmem [#allocation10], %s223
          %s225 = sld [smem:[#allocation8 + %s51]]
          %s226 = ssub.s32 1, %s52
          %s227 = smul.u32 %s225, %s226
          %s228 = sadd.s32 %s52, %s227
          %s229 = sld [smem:[#allocation4 + %s51]]
          %s230 = smul.u32 2, %s228
          %s231 = smul.addr %s229, 64
          %s232 = sadd.s32 %s230, %s231
          %s233 = smul.addr %s232, 4
          %s234 = scalar_lea.vmem %s7, %s233
          // Predicated region
          $region25: #{grouped_swiglu.1} parent=23 // pred_check
            _
          $region26: #{grouped_swiglu.1} parent=23 // pred_check_branch
            %236 = sbr.rel (0) target = $region28
          $region27: #{grouped_swiglu.1} parent=23 // pred_region
            // Predicated region
            $region29: #{grouped_swiglu.1} parent=27 // pred_check
              _
            $region30: #{grouped_swiglu.1} parent=27 // pred_check_branch
              %238 = sbr.rel (0) target = $region32
            $region31: #{grouped_swiglu.1} parent=27 // pred_region
              // Predicated region
              $region44: #{grouped_swiglu.1} parent=31 // pred_check
                _
              $region45: #{grouped_swiglu.1} parent=31 // pred_check_branch
                %284 = sbr.rel (0) target = $region47
              $region46: #{grouped_swiglu.1} parent=31 // pred_region
                loop: start=0, step=1, limit=1
                $region48: #{grouped_swiglu.1} parent=46 // loop_pre_header
                  _
                $region49: #{grouped_swiglu.1} parent=46 // loop_header
                  %s286 = sphi 0, %s290
                  %p287 = scmp.ge.s32.totalorder %s286, 1
                  %s291 = sphi %s234, %s234
                  %s292 = sphi %s224, %s224
                $region50: #{grouped_swiglu.1} parent=46 // loop_header_branch
                  %289 = sbr.rel (%p287) target = $region54
                $region51: #{grouped_swiglu.1} parent=46 // loop_body
                  %v293 = vld [vmem:[%s291] sm:$0xff]
                  %294 = vst [vmem:[%s292] sm:$0xff] %v293
                  %v295 = vld [vmem:[%s291 + $0x10] sm:$0xff]
                  %296 = vst [vmem:[%s292 + $0x8] sm:$0xff] %v295
                  %v297 = vld [vmem:[%s291 + $0x20] sm:$0xff]
                  %298 = vst [vmem:[%s292 + $0x10] sm:$0xff] %v297
                  %v299 = vld [vmem:[%s291 + $0x30] sm:$0xff]
                  %300 = vst [vmem:[%s292 + $0x18] sm:$0xff] %v299
                  %v301 = vld [vmem:[%s291 + $0x40] sm:$0xff]
                  %302 = vst [vmem:[%s292 + $0x20] sm:$0xff] %v301
                  %v303 = vld [vmem:[%s291 + $0x50] sm:$0xff]
                  %304 = vst [vmem:[%s292 + $0x28] sm:$0xff] %v303
                  %v305 = vld [vmem:[%s291 + $0x60] sm:$0xff]
                  %306 = vst [vmem:[%s292 + $0x30] sm:$0xff] %v305
                  %v307 = vld [vmem:[%s291 + $0x70] sm:$0xff]
                  %308 = vst [vmem:[%s292 + $0x38] sm:$0xff] %v307
                  %v309 = vld [vmem:[%s291 + $0x80] sm:$0xff]
                  %310 = vst [vmem:[%s292 + $0x40] sm:$0xff] %v309
                  %v311 = vld [vmem:[%s291 + $0x90] sm:$0xff]
                  %312 = vst [vmem:[%s292 + $0x48] sm:$0xff] %v311
                  %v313 = vld [vmem:[%s291 + $0xa0] sm:$0xff]
                  %314 = vst [vmem:[%s292 + $0x50] sm:$0xff] %v313
                  %v315 = vld [vmem:[%s291 + $0xb0] sm:$0xff]
                  %316 = vst [vmem:[%s292 + $0x58] sm:$0xff] %v315
                  %v317 = vld [vmem:[%s291 + $0xc0] sm:$0xff]
                  %318 = vst [vmem:[%s292 + $0x60] sm:$0xff] %v317
                  %v319 = vld [vmem:[%s291 + $0xd0] sm:$0xff]
                  %320 = vst [vmem:[%s292 + $0x68] sm:$0xff] %v319
                  %v321 = vld [vmem:[%s291 + $0xe0] sm:$0xff]
                  %322 = vst [vmem:[%s292 + $0x70] sm:$0xff] %v321
                  %v323 = vld [vmem:[%s291 + $0xf0] sm:$0xff]
                  %324 = vst [vmem:[%s292 + $0x78] sm:$0xff] %v323
                $region52: #{grouped_swiglu.1} parent=46 // loop_footer
                  %s290 = sadd.s32 1, %s286
                $region53: #{grouped_swiglu.1} parent=46 // loop_footer_branch
                  %285 = sbr.rel target = $region49
                $region54: #{grouped_swiglu.1} parent=46 // loop_exit
                  _
              $region47: #{grouped_swiglu.1} parent=31 // pred_fallthru
                _
              // Predicated region
              $region55: #{grouped_swiglu.1} parent=31 // pred_check
                _
              $region56: #{grouped_swiglu.1} parent=31 // pred_check_branch
                %326 = sbr.rel target = $region58
              $region57: #{grouped_swiglu.1} parent=31 // pred_region
                _
              $region58: #{grouped_swiglu.1} parent=31 // pred_fallthru
                _
            $region32: #{grouped_swiglu.1} parent=27 // pred_fallthru
              _
            // Predicated region
            $region33: #{grouped_swiglu.1} parent=27 // pred_check
              _
            $region34: #{grouped_swiglu.1} parent=27 // pred_check_branch
              %240 = sbr.rel target = $region36
            $region35: #{grouped_swiglu.1} parent=27 // pred_region
              %s242 = ssub.s32 256, 1
              loop: start=0, step=1, limit=1
              $region37: #{grouped_swiglu.1} parent=35 // loop_pre_header
                _
              $region38: #{grouped_swiglu.1} parent=35 // loop_header
                %s244 = sphi 0, %s248
                %p245 = scmp.ge.s32.totalorder %s244, 1
                %s249 = sphi %s234, %s234
                %s250 = sphi %s224, %s224
              $region39: #{grouped_swiglu.1} parent=35 // loop_header_branch
                %247 = sbr.rel (%p245) target = $region43
              $region40: #{grouped_swiglu.1} parent=35 // loop_body
                %v251 = vld [vmem:[%s249] sm:%s242]
                %252 = vst [vmem:[%s250] sm:%s242] %v251
                %v253 = vld [vmem:[%s249 + $0x10] sm:%s242]
                %254 = vst [vmem:[%s250 + $0x8] sm:%s242] %v253
                %v255 = vld [vmem:[%s249 + $0x20] sm:%s242]
                %256 = vst [vmem:[%s250 + $0x10] sm:%s242] %v255
                %v257 = vld [vmem:[%s249 + $0x30] sm:%s242]
                %258 = vst [vmem:[%s250 + $0x18] sm:%s242] %v257
                %v259 = vld [vmem:[%s249 + $0x40] sm:%s242]
                %260 = vst [vmem:[%s250 + $0x20] sm:%s242] %v259
                %v261 = vld [vmem:[%s249 + $0x50] sm:%s242]
                %262 = vst [vmem:[%s250 + $0x28] sm:%s242] %v261
                %v263 = vld [vmem:[%s249 + $0x60] sm:%s242]
                %264 = vst [vmem:[%s250 + $0x30] sm:%s242] %v263
                %v265 = vld [vmem:[%s249 + $0x70] sm:%s242]
                %266 = vst [vmem:[%s250 + $0x38] sm:%s242] %v265
                %v267 = vld [vmem:[%s249 + $0x80] sm:%s242]
                %268 = vst [vmem:[%s250 + $0x40] sm:%s242] %v267
                %v269 = vld [vmem:[%s249 + $0x90] sm:%s242]
                %270 = vst [vmem:[%s250 + $0x48] sm:%s242] %v269
                %v271 = vld [vmem:[%s249 + $0xa0] sm:%s242]
                %272 = vst [vmem:[%s250 + $0x50] sm:%s242] %v271
                %v273 = vld [vmem:[%s249 + $0xb0] sm:%s242]
                %274 = vst [vmem:[%s250 + $0x58] sm:%s242] %v273
                %v275 = vld [vmem:[%s249 + $0xc0] sm:%s242]
                %276 = vst [vmem:[%s250 + $0x60] sm:%s242] %v275
                %v277 = vld [vmem:[%s249 + $0xd0] sm:%s242]
                %278 = vst [vmem:[%s250 + $0x68] sm:%s242] %v277
                %v279 = vld [vmem:[%s249 + $0xe0] sm:%s242]
                %280 = vst [vmem:[%s250 + $0x70] sm:%s242] %v279
                %v281 = vld [vmem:[%s249 + $0xf0] sm:%s242]
                %282 = vst [vmem:[%s250 + $0x78] sm:%s242] %v281
              $region41: #{grouped_swiglu.1} parent=35 // loop_footer
                %s248 = sadd.s32 1, %s244
              $region42: #{grouped_swiglu.1} parent=35 // loop_footer_branch
                %243 = sbr.rel target = $region38
              $region43: #{grouped_swiglu.1} parent=35 // loop_exit
                _
            $region36: #{grouped_swiglu.1} parent=27 // pred_fallthru
              _
          $region28: #{grouped_swiglu.1} parent=23 // pred_fallthru
            _
          %327 = vnop
        $region24: #{grouped_swiglu.1} parent=15 // pred_fallthru
          _
        // Predicated region
        $region59: #{grouped_swiglu.1} parent=15 // pred_check
          %p328 = pneg %p154
        $region60: #{grouped_swiglu.1} parent=15 // pred_check_branch
          %330 = sbr.rel (%p328) target = $region62
        $region61: #{grouped_swiglu.1} parent=15 // pred_region
          %s331 = sld [smem:[#allocation8 + %s51]]
          %s332 = ssub.s32 1, %s52
          %s333 = smul.u32 %s331, %s332
          %s334 = sadd.s32 %s52, %s333
          %s335 = sld [smem:[#allocation4 + %s51]]
          %s336 = smul.u32 16, %s334
          %p337 = scmp.lt.s32.totalorder %s335, 3
          %s338 = scalar_select %p337, %s335, 3
          %p339 = scmp.lt.s32.totalorder %s336, 31
          %s340 = scalar_select %p339, %s336, 31
          %s341 = smul.addr %s338, 32
          %s342 = sadd.s32 %s340, %s341
          %s343 = smul.addr %s342, 4
          %s344 = scalar_lea.vmem %s8, %s343
          %s345 = sld [smem:[#allocation8 + %s51]]
          %s346 = ssub.s32 1, %s52
          %s347 = smul.u32 %s345, %s346
          %s348 = sadd.s32 %s52, %s347
          %s349 = sld [smem:[#allocation4 + %s51]]
          %s350 = smul.u32 16, %s348
        $region62: #{grouped_swiglu.1} parent=15 // pred_fallthru
          _
      $region16: #{grouped_swiglu.1} parent=5 // pred_fallthru
        _
      %p351 = scmp.le.s32.totalorder 1, %s44
      %p352 = scmp.lt.s32.totalorder %s44, 11
      %p353 = pnand %p351, %p352
      %p354 = pneg %p353
      // Predicated region
      $region63: #{grouped_swiglu.1} parent=5 // pred_check
        _
      $region64: #{grouped_swiglu.1} parent=5 // pred_check_branch
        %356 = sbr.rel (%p353) target = $region66
      $region65: #{grouped_swiglu.1} parent=5 // pred_region
        %s357 = ssub.s32 %s44, 1
        %s358 = sand.u32 %s109, 1
        %s359 = sand.u32 %s109, 1
        %s360 = smul.addr %s359, 128
        %s361 = scalar_lea.vmem [#allocation10], %s360
        // Predicated region
        $region67: #{grouped_swiglu.1} parent=65 // pred_check
          %p362 = pneg %p122
        $region68: #{grouped_swiglu.1} parent=65 // pred_check_branch
          %364 = sbr.rel (%p362) target = $region70
        $region69: #{grouped_swiglu.1} parent=65 // pred_region
          _
        $region70: #{grouped_swiglu.1} parent=65 // pred_fallthru
          _
        %s365 = sld [smem:[#allocation5 + %s53]]
        %s366 = smul.u32 16, %s365
        %p367 = scmp.lt.s32.totalorder %s366, 31
        %s368 = scalar_select %p367, %s366, 31
        %s369 = smul.addr %s368, 4
        %s370 = scalar_lea.vmem %s6, %s369
        %p371 = pneg %p84
        %p372 = pneg %p81
        %s373 = sand.u32 %s109, 1
        %s374 = sand.u32 %s109, 1
        %s375 = smul.addr %s374, 128
        %s376 = scalar_lea.vmem [#allocation10], %s375
        %p377 = pneg %p122
        %p378 = pneg %p119
        %s379 = sld [smem:[#allocation8 + %s53]]
        %s380 = ssub.s32 1, %s54
        %s381 = smul.u32 %s379, %s380
        %s382 = sadd.s32 %s54, %s381
        %s383 = sld [smem:[#allocation4 + %s53]]
        %s384 = smul.u32 16, %s382
        %p385 = scmp.lt.s32.totalorder %s383, 3
        %s386 = scalar_select %p385, %s383, 3
        %p387 = scmp.lt.s32.totalorder %s384, 31
        %s388 = scalar_select %p387, %s384, 31
        %s389 = smul.addr %s386, 32
        %s390 = sadd.s32 %s388, %s389
        %s391 = smul.addr %s390, 4
        %s392 = scalar_lea.vmem %s8, %s391
        %p393 = pneg %p160
        %p394 = pneg %p157
        %p395 = pneg %p188
        %p396 = pneg %p185
        %s397 = sand.u32 %s175, 1
        %s398 = scalar_lea.sflag [#allocation12], %s397
        %s399 = sand.u32 %s175, 1
        %s400 = smul.addr %s399, 128
        %s401 = scalar_lea.vmem [#allocation11], %s400
        %s402 = sld [smem:[#allocation5 + %s53]]
        %s403 = smul.u32 16, %s402
        %p404 = scmp.lt.s32.totalorder %s403, 31
        %s405 = scalar_select %p404, %s403, 31
        %s406 = smul.addr %s405, 4
        %s407 = scalar_lea.vmem %s6, %s406
        %s408 = sld [smem:[#allocation5 + %s53]]
        %s409 = smul.u32 16, %s408
        %s410 = sld [smem:[#allocation8 + %s53]]
        %s411 = ssub.s32 1, %s54
        %s412 = smul.u32 %s410, %s411
        %s413 = sadd.s32 %s54, %s412
        %s414 = sld [smem:[#allocation4 + %s53]]
        %s415 = smul.u32 2, %s413
        %s416 = sld [smem:[#allocation8 + %s53]]
        %s417 = ssub.s32 1, %s54
        %s418 = smul.u32 %s416, %s417
        %s419 = sadd.s32 %s54, %s418
        %s420 = sld [smem:[#allocation4 + %s53]]
        %s421 = smul.u32 16, %s419
        %p422 = scmp.lt.s32.totalorder %s420, 3
        %s423 = scalar_select %p422, %s420, 3
        %p424 = scmp.lt.s32.totalorder %s421, 31
        %s425 = scalar_select %p424, %s421, 31
        %s426 = smul.addr %s423, 32
        %s427 = sadd.s32 %s425, %s426
        %s428 = smul.addr %s427, 4
        %s429 = scalar_lea.vmem %s8, %s428
        %s430 = sld [smem:[#allocation8 + %s53]]
        %s431 = ssub.s32 1, %s54
        %s432 = smul.u32 %s430, %s431
        %s433 = sadd.s32 %s54, %s432
        %s434 = sld [smem:[#allocation4 + %s53]]
        %s435 = smul.u32 16, %s433
        %s436 = sld [smem:[#allocation5 + %s53]]
        %s437 = smul.u32 16, %s436
        %s439 = sld [smem:[#allocation8 + %s53]]
        %p440 = scmp.eq.s32.totalorder %s439, 0
        %p441 = scmp.eq.s32.totalorder %s54, 0
        %p442 = pnand %p440, %p441
        %p443 = pneg %p442
        // Predicated region
        $region71: #{grouped_swiglu.1} parent=65 // pred_check
          _
        $region72: #{grouped_swiglu.1} parent=65 // pred_check_branch
          %445 = sbr.rel (%p442) target = $region74
        $region73: #{grouped_swiglu.1} parent=65 // pred_region
          %446 = vst [vmem:[#allocation2] sm:$0xff] 0.0
          %447 = vst [vmem:[#allocation2 + $0x8] sm:$0xff] 0.0
          %448 = vst [vmem:[#allocation2 + $0x10] sm:$0xff] 0.0
          %449 = vst [vmem:[#allocation2 + $0x18] sm:$0xff] 0.0
          %450 = vst [vmem:[#allocation2 + $0x20] sm:$0xff] 0.0
          %451 = vst [vmem:[#allocation2 + $0x28] sm:$0xff] 0.0
          %452 = vst [vmem:[#allocation2 + $0x30] sm:$0xff] 0.0
          %453 = vst [vmem:[#allocation2 + $0x38] sm:$0xff] 0.0
          %454 = vst [vmem:[#allocation2 + $0x40] sm:$0xff] 0.0
          %455 = vst [vmem:[#allocation2 + $0x48] sm:$0xff] 0.0
          %456 = vst [vmem:[#allocation2 + $0x50] sm:$0xff] 0.0
          %457 = vst [vmem:[#allocation2 + $0x58] sm:$0xff] 0.0
          %458 = vst [vmem:[#allocation2 + $0x60] sm:$0xff] 0.0
          %459 = vst [vmem:[#allocation2 + $0x68] sm:$0xff] 0.0
          %460 = vst [vmem:[#allocation2 + $0x70] sm:$0xff] 0.0
          %461 = vst [vmem:[#allocation2 + $0x78] sm:$0xff] 0.0
        $region74: #{grouped_swiglu.1} parent=65 // pred_fallthru
          _
        // Predicated region
        $region75: #{grouped_swiglu.1} parent=65 // pred_check
          %p462 = pneg %p440
        $region76: #{grouped_swiglu.1} parent=65 // pred_check_branch
          %464 = sbr.rel (%p462) target = $region78
        $region77: #{grouped_swiglu.1} parent=65 // pred_region
          %v465 = vld [vmem:[#allocation2] sm:$0xff]
          %v466 = vld [vmem:[#allocation2 + $0x8] sm:$0xff]
          %v467 = vld [vmem:[#allocation2 + $0x10] sm:$0xff]
          %v468 = vld [vmem:[#allocation2 + $0x18] sm:$0xff]
          %v469 = vld [vmem:[#allocation2 + $0x20] sm:$0xff]
          %v470 = vld [vmem:[#allocation2 + $0x28] sm:$0xff]
          %v471 = vld [vmem:[#allocation2 + $0x30] sm:$0xff]
          %v472 = vld [vmem:[#allocation2 + $0x38] sm:$0xff]
          %v473 = vld [vmem:[#allocation2 + $0x40] sm:$0xff]
          %v474 = vld [vmem:[#allocation2 + $0x48] sm:$0xff]
          %v475 = vld [vmem:[#allocation2 + $0x50] sm:$0xff]
          %v476 = vld [vmem:[#allocation2 + $0x58] sm:$0xff]
          %v477 = vld [vmem:[#allocation2 + $0x60] sm:$0xff]
          %v478 = vld [vmem:[#allocation2 + $0x68] sm:$0xff]
          %v479 = vld [vmem:[#allocation2 + $0x70] sm:$0xff]
          %v480 = vld [vmem:[#allocation2 + $0x78] sm:$0xff]
          %v481 = vld [vmem:[%s407] sm:$0xf]
          %v482 = vld [vmem:[%s407 + $0x4] sm:$0xf]
          %v483 = vld [vmem:[%s407 + $0x8] sm:$0xf]
          %v484 = vld [vmem:[%s407 + $0xc] sm:$0xf]
          %v485 = vld [vmem:[%s407 + $0x10] sm:$0xf]
          %v486 = vld [vmem:[%s407 + $0x14] sm:$0xf]
          %v487 = vld [vmem:[%s407 + $0x18] sm:$0xf]
          %v488 = vld [vmem:[%s407 + $0x1c] sm:$0xf]
          %v489 = vld [vmem:[%s407 + $0x20] sm:$0xf]
          %v490 = vld [vmem:[%s407 + $0x24] sm:$0xf]
          %v491 = vld [vmem:[%s407 + $0x28] sm:$0xf]
          %v492 = vld [vmem:[%s407 + $0x2c] sm:$0xf]
          %v493 = vld [vmem:[%s407 + $0x30] sm:$0xf]
          %v494 = vld [vmem:[%s407 + $0x34] sm:$0xf]
          %v495 = vld [vmem:[%s407 + $0x38] sm:$0xf]
          %v496 = vld [vmem:[%s407 + $0x3c] sm:$0xf]
          %v497 = vld [vmem:[%s361] sm:$0xff]
          %v498 = vld [vmem:[%s361 + $0x8] sm:$0xff]
          %v499 = vld [vmem:[%s361 + $0x10] sm:$0xff]
          %v500 = vld [vmem:[%s361 + $0x18] sm:$0xff]
          %v501 = vld [vmem:[%s361 + $0x20] sm:$0xff]
          %v502 = vld [vmem:[%s361 + $0x28] sm:$0xff]
          %v503 = vld [vmem:[%s361 + $0x30] sm:$0xff]
          %v504 = vld [vmem:[%s361 + $0x38] sm:$0xff]
          %v505 = vld [vmem:[%s361 + $0x40] sm:$0xff]
          %v506 = vld [vmem:[%s361 + $0x48] sm:$0xff]
          %v507 = vld [vmem:[%s361 + $0x50] sm:$0xff]
          %v508 = vld [vmem:[%s361 + $0x58] sm:$0xff]
          %v509 = vld [vmem:[%s361 + $0x60] sm:$0xff]
          %v510 = vld [vmem:[%s361 + $0x68] sm:$0xff]
          %v511 = vld [vmem:[%s361 + $0x70] sm:$0xff]
          %v512 = vld [vmem:[%s361 + $0x78] sm:$0xff]
          %v529 = vunpack.c.l.b16 %v481
          %v530 = vunpack.c.l.b16 %v482
          %v531 = vunpack.c.l.b16 %v483
          %v532 = vunpack.c.l.b16 %v484
          %v533 = vunpack.c.l.b16 %v485
          %v534 = vunpack.c.l.b16 %v486
          %v535 = vunpack.c.l.b16 %v487
          %v536 = vunpack.c.l.b16 %v488
          %v537 = vunpack.c.l.b16 %v489
          %v538 = vunpack.c.l.b16 %v490
          %v539 = vunpack.c.l.b16 %v491
          %v540 = vunpack.c.l.b16 %v492
          %v541 = vunpack.c.l.b16 %v493
          %v542 = vunpack.c.l.b16 %v494
          %v543 = vunpack.c.l.b16 %v495
          %v544 = vunpack.c.l.b16 %v496
          %v545 = vpack.c.b16 %v530, %v529
          %v546 = vpack.c.b16 %v532, %v531
          %v547 = vpack.c.b16 %v534, %v533
          %v548 = vpack.c.b16 %v536, %v535
          %v549 = vpack.c.b16 %v538, %v537
          %v550 = vpack.c.b16 %v540, %v539
          %v551 = vpack.c.b16 %v542, %v541
          %v552 = vpack.c.b16 %v544, %v543
          %v577 = vunpack.c.l.b16 %v497
          %v578 = vunpack.c.h.b16 %v497
          %v579 = vunpack.c.l.b16 %v498
          %v580 = vunpack.c.h.b16 %v498
          %v581 = vunpack.c.l.b16 %v499
          %v582 = vunpack.c.h.b16 %v499
          %v583 = vunpack.c.l.b16 %v500
          %v584 = vunpack.c.h.b16 %v500
          %v585 = vunpack.c.l.b16 %v501
          %v586 = vunpack.c.h.b16 %v501
          %v587 = vunpack.c.l.b16 %v502
          %v588 = vunpack.c.h.b16 %v502
          %v589 = vunpack.c.l.b16 %v503
          %v590 = vunpack.c.h.b16 %v503
          %v591 = vunpack.c.l.b16 %v504
          %v592 = vunpack.c.h.b16 %v504
          %v593 = vunpack.c.l.b16 %v505
          %v594 = vunpack.c.h.b16 %v505
          %v595 = vunpack.c.l.b16 %v506
          %v596 = vunpack.c.h.b16 %v506
          %v597 = vunpack.c.l.b16 %v507
          %v598 = vunpack.c.h.b16 %v507
          %v599 = vunpack.c.l.b16 %v508
          %v600 = vunpack.c.h.b16 %v508
          %v601 = vunpack.c.l.b16 %v509
          %v602 = vunpack.c.h.b16 %v509
          %v603 = vunpack.c.l.b16 %v510
          %v604 = vunpack.c.h.b16 %v510
          %v605 = vunpack.c.l.b16 %v511
          %v606 = vunpack.c.h.b16 %v511
          %v607 = vunpack.c.l.b16 %v512
          %v608 = vunpack.c.h.b16 %v512
          %v609 = vpack.c.b16 %v579, %v577
          %v610 = vpack.c.b16 %v580, %v578
          %v611 = vpack.c.b16 %v583, %v581
          %v612 = vpack.c.b16 %v584, %v582
          %v613 = vpack.c.b16 %v587, %v585
          %v614 = vpack.c.b16 %v588, %v586
          %v615 = vpack.c.b16 %v591, %v589
          %v616 = vpack.c.b16 %v592, %v590
          %v617 = vpack.c.b16 %v595, %v593
          %v618 = vpack.c.b16 %v596, %v594
          %v619 = vpack.c.b16 %v599, %v597
          %v620 = vpack.c.b16 %v600, %v598
          %v621 = vpack.c.b16 %v603, %v601
          %v622 = vpack.c.b16 %v604, %v602
          %v623 = vpack.c.b16 %v607, %v605
          %v624 = vpack.c.b16 %v608, %v606
          %641 = vmatprep.subr.bf16.mxu0 %v624
          %642 = vmatpush1.bf16.msra.mxu0 %v623
          %643 = vmatprep.subr.bf16.mxu0 %v622
          %644 = vmatpush1.bf16.msra.mxu0 %v621
          %645 = vmatprep.subr.bf16.mxu0 %v620
          %646 = vmatpush1.bf16.msra.mxu0 %v619
          %647 = vmatprep.subr.bf16.mxu0 %v618
          %648 = vmatpush1.bf16.msra.mxu0 %v617
          %649 = vmatprep.subr.bf16.mxu0 %v616
          %650 = vmatpush1.bf16.msra.mxu0 %v615
          %651 = vmatprep.subr.bf16.mxu0 %v614
          %652 = vmatpush1.bf16.msra.mxu0 %v613
          %653 = vmatprep.subr.bf16.mxu0 %v612
          %654 = vmatpush1.bf16.msra.mxu0 %v611
          %655 = vmatprep.subr.bf16.mxu0 %v610
          %656 = vmatpush1.bf16.msra.mxu0 %v609
          %657 = vmatprep.subr.bf16.mxu0 0
          %658 = vmatpush2.bf16.msra.mxu0 0
          %659 = vmatprep.subr.bf16.mxu0 0
          %660 = vmatpush2.bf16.msra.mxu0 0
          %661 = vmatprep.subr.bf16.mxu0 0
          %662 = vmatpush2.bf16.msra.mxu0 0
          %663 = vmatprep.subr.bf16.mxu0 0
          %664 = vmatpush2.bf16.msra.mxu0 0
          %665 = vmatprep.subr.bf16.mxu0 0
          %666 = vmatpush2.bf16.msra.mxu0 0
          %667 = vmatprep.subr.bf16.mxu0 0
          %668 = vmatpush2.bf16.msra.mxu0 0
          %669 = vmatprep.subr.bf16.mxu0 0
          %670 = vmatpush2.bf16.msra.mxu0 0
          %671 = vmatprep.subr.bf16.mxu0 0
          %672 = vmatpush2.bf16.msra.mxu0 0
          %673 = vmatprep.mubr.bf16.mxu0 0
          %674 = vmatmul.mubr.bf16.gmra.mxu0 %v545
          %v675 = vpop.f32.mrf.mxu0
          %v676 = vadd.f32 0.0, %v675
          %v677 = vpop.f32.mrf.mxu0
          %v678 = vadd.f32 0.0, %v677
          %v679 = vpop.f32.mrf.mxu0
          %v680 = vadd.f32 0.0, %v679
          %v681 = vpop.f32.mrf.mxu0
          %v682 = vadd.f32 0.0, %v681
          %683 = vmatprep.mubr.bf16.mxu0 0
          %684 = vmatmul.mubr.bf16.gmra.mxu0 %v546
          %v685 = vpop.f32.mrf.mxu0
          %v686 = vadd.f32 0.0, %v685
          %v687 = vpop.f32.mrf.mxu0
          %v688 = vadd.f32 0.0, %v687
          %v689 = vpop.f32.mrf.mxu0
          %v690 = vadd.f32 0.0, %v689
          %v691 = vpop.f32.mrf.mxu0
          %v692 = vadd.f32 0.0, %v691
          %693 = vmatprep.mubr.bf16.mxu0 0
          %694 = vmatmul.mubr.bf16.gmra.mxu0 %v547
          %v695 = vpop.f32.mrf.mxu0
          %v696 = vadd.f32 0.0, %v695
          %v697 = vpop.f32.mrf.mxu0
          %v698 = vadd.f32 0.0, %v697
          %v699 = vpop.f32.mrf.mxu0
          %v700 = vadd.f32 0.0, %v699
          %v701 = vpop.f32.mrf.mxu0
          %v702 = vadd.f32 0.0, %v701
          %703 = vmatprep.mubr.bf16.mxu0 0
          %704 = vmatmul.mubr.bf16.gmra.mxu0 %v548
          %v705 = vpop.f32.mrf.mxu0
          %v706 = vadd.f32 0.0, %v705
          %v707 = vpop.f32.mrf.mxu0
          %v708 = vadd.f32 0.0, %v707
          %v709 = vpop.f32.mrf.mxu0
          %v710 = vadd.f32 0.0, %v709
          %v711 = vpop.f32.mrf.mxu0
          %v712 = vadd.f32 0.0, %v711
          %713 = vmatprep.mubr.bf16.mxu0 0
          %714 = vmatmul.mubr.bf16.gmra.mxu0 %v549
          %v715 = vpop.f32.mrf.mxu0
          %v716 = vadd.f32 0.0, %v715
          %v717 = vpop.f32.mrf.mxu0
          %v718 = vadd.f32 0.0, %v717
          %v719 = vpop.f32.mrf.mxu0
          %v720 = vadd.f32 0.0, %v719
          %v721 = vpop.f32.mrf.mxu0
          %v722 = vadd.f32 0.0, %v721
          %723 = vmatprep.mubr.bf16.mxu0 0
          %724 = vmatmul.mubr.bf16.gmra.mxu0 %v550
          %v725 = vpop.f32.mrf.mxu0
          %v726 = vadd.f32 0.0, %v725
          %v727 = vpop.f32.mrf.mxu0
          %v728 = vadd.f32 0.0, %v727
          %v729 = vpop.f32.mrf.mxu0
          %v730 = vadd.f32 0.0, %v729
          %v731 = vpop.f32.mrf.mxu0
          %v732 = vadd.f32 0.0, %v731
          %733 = vmatprep.mubr.bf16.mxu0 0
          %734 = vmatmul.mubr.bf16.gmra.mxu0 %v551
          %v735 = vpop.f32.mrf.mxu0
          %v736 = vadd.f32 0.0, %v735
          %v737 = vpop.f32.mrf.mxu0
          %v738 = vadd.f32 0.0, %v737
          %v739 = vpop.f32.mrf.mxu0
          %v740 = vadd.f32 0.0, %v739
          %v741 = vpop.f32.mrf.mxu0
          %v742 = vadd.f32 0.0, %v741
          %743 = vmatprep.mubr.bf16.mxu0 0
          %744 = vmatmul.mubr.bf16.gmra.mxu0 %v552
          %v745 = vpop.f32.mrf.mxu0
          %v746 = vadd.f32 0.0, %v745
          %v747 = vpop.f32.mrf.mxu0
          %v748 = vadd.f32 0.0, %v747
          %v749 = vpop.f32.mrf.mxu0
          %v750 = vadd.f32 0.0, %v749
          %v751 = vpop.f32.mrf.mxu0
          %v752 = vadd.f32 0.0, %v751
          %753 = vdwg.mxu0
          %v754 = vxor.u32 %v676, 2147483648
          %v755 = vxor.u32 %v680, 2147483648
          %v756 = vxor.u32 %v686, 2147483648
          %v757 = vxor.u32 %v690, 2147483648
          %v758 = vxor.u32 %v696, 2147483648
          %v759 = vxor.u32 %v700, 2147483648
          %v760 = vxor.u32 %v706, 2147483648
          %v761 = vxor.u32 %v710, 2147483648
          %v762 = vxor.u32 %v716, 2147483648
          %v763 = vxor.u32 %v720, 2147483648
          %v764 = vxor.u32 %v726, 2147483648
          %v765 = vxor.u32 %v730, 2147483648
          %v766 = vxor.u32 %v736, 2147483648
          %v767 = vxor.u32 %v740, 2147483648
          %v768 = vxor.u32 %v746, 2147483648
          %v769 = vxor.u32 %v750, 2147483648
          %v770 = vmul.f32 %v754, 1.442695
          %v771 = vpow.pop %v770
          %v772 = vmul.f32 %v755, 1.442695
          %v773 = vpow.pop %v772
          %v774 = vmul.f32 %v756, 1.442695
          %v775 = vpow.pop %v774
          %v776 = vmul.f32 %v757, 1.442695
          %v777 = vpow.pop %v776
          %v778 = vmul.f32 %v758, 1.442695
          %v779 = vpow.pop %v778
          %v780 = vmul.f32 %v759, 1.442695
          %v781 = vpow.pop %v780
          %v782 = vmul.f32 %v760, 1.442695
          %v783 = vpow.pop %v782
          %v784 = vmul.f32 %v761, 1.442695
          %v785 = vpow.pop %v784
          %v786 = vmul.f32 %v762, 1.442695
          %v787 = vpow.pop %v786
          %v788 = vmul.f32 %v763, 1.442695
          %v789 = vpow.pop %v788
          %v790 = vmul.f32 %v764, 1.442695
          %v791 = vpow.pop %v790
          %v792 = vmul.f32 %v765, 1.442695
          %v793 = vpow.pop %v792
          %v794 = vmul.f32 %v766, 1.442695
          %v795 = vpow.pop %v794
          %v796 = vmul.f32 %v767, 1.442695
          %v797 = vpow.pop %v796
          %v798 = vmul.f32 %v768, 1.442695
          %v799 = vpow.pop %v798
          %v800 = vmul.f32 %v769, 1.442695
          %v801 = vpow.pop %v800
          %v802 = vadd.f32 %v771, 1.0
          %v803 = vadd.f32 %v773, 1.0
          %v804 = vadd.f32 %v775, 1.0
          %v805 = vadd.f32 %v777, 1.0
          %v806 = vadd.f32 %v779, 1.0
          %v807 = vadd.f32 %v781, 1.0
          %v808 = vadd.f32 %v783, 1.0
          %v809 = vadd.f32 %v785, 1.0
          %v810 = vadd.f32 %v787, 1.0
          %v811 = vadd.f32 %v789, 1.0
          %v812 = vadd.f32 %v791, 1.0
          %v813 = vadd.f32 %v793, 1.0
          %v814 = vadd.f32 %v795, 1.0
          %v815 = vadd.f32 %v797, 1.0
          %v816 = vadd.f32 %v799, 1.0
          %v817 = vadd.f32 %v801, 1.0
          %v818 = vrcp.pop %v802
          %v819 = vmul.f32 1.0, %v818
          %v820 = vrcp.pop %v803
          %v821 = vmul.f32 1.0, %v820
          %v822 = vrcp.pop %v804
          %v823 = vmul.f32 1.0, %v822
          %v824 = vrcp.pop %v805
          %v825 = vmul.f32 1.0, %v824
          %v826 = vrcp.pop %v806
          %v827 = vmul.f32 1.0, %v826
          %v828 = vrcp.pop %v807
          %v829 = vmul.f32 1.0, %v828
          %v830 = vrcp.pop %v808
          %v831 = vmul.f32 1.0, %v830
          %v832 = vrcp.pop %v809
          %v833 = vmul.f32 1.0, %v832
          %v834 = vrcp.pop %v810
          %v835 = vmul.f32 1.0, %v834
          %v836 = vrcp.pop %v811
          %v837 = vmul.f32 1.0, %v836
          %v838 = vrcp.pop %v812
          %v839 = vmul.f32 1.0, %v838
          %v840 = vrcp.pop %v813
          %v841 = vmul.f32 1.0, %v840
          %v842 = vrcp.pop %v814
          %v843 = vmul.f32 1.0, %v842
          %v844 = vrcp.pop %v815
          %v845 = vmul.f32 1.0, %v844
          %v846 = vrcp.pop %v816
          %v847 = vmul.f32 1.0, %v846
          %v848 = vrcp.pop %v817
          %v849 = vmul.f32 1.0, %v848
          %v850 = vmul.f32 %v676, %v819
          %v851 = vmul.f32 %v680, %v821
          %v852 = vmul.f32 %v686, %v823
          %v853 = vmul.f32 %v690, %v825
          %v854 = vmul.f32 %v696, %v827
          %v855 = vmul.f32 %v700, %v829
          %v856 = vmul.f32 %v706, %v831
          %v857 = vmul.f32 %v710, %v833
          %v858 = vmul.f32 %v716, %v835
          %v859 = vmul.f32 %v720, %v837
          %v860 = vmul.f32 %v726, %v839
          %v861 = vmul.f32 %v730, %v841
          %v862 = vmul.f32 %v736, %v843
          %v863 = vmul.f32 %v740, %v845
          %v864 = vmul.f32 %v746, %v847
          %v865 = vmul.f32 %v750, %v849
          %v866 = vmul.f32 %v850, %v678
          %v867 = vmul.f32 %v851, %v682
          %v868 = vmul.f32 %v852, %v688
          %v869 = vmul.f32 %v853, %v692
          %v870 = vmul.f32 %v854, %v698
          %v871 = vmul.f32 %v855, %v702
          %v872 = vmul.f32 %v856, %v708
          %v873 = vmul.f32 %v857, %v712
          %v874 = vmul.f32 %v858, %v718
          %v875 = vmul.f32 %v859, %v722
          %v876 = vmul.f32 %v860, %v728
          %v877 = vmul.f32 %v861, %v732
          %v878 = vmul.f32 %v862, %v738
          %v879 = vmul.f32 %v863, %v742
          %v880 = vmul.f32 %v864, %v748
          %v881 = vmul.f32 %v865, %v752
          %v882 = vpack.c.bf16 %v867, %v866
          %v883 = vpack.c.bf16 %v869, %v868
          %v884 = vpack.c.bf16 %v871, %v870
          %v885 = vpack.c.bf16 %v873, %v872
          %v886 = vpack.c.bf16 %v875, %v874
          %v887 = vpack.c.bf16 %v877, %v876
          %v888 = vpack.c.bf16 %v879, %v878
          %v889 = vpack.c.bf16 %v881, %v880
          %v890 = vld [vmem:[%s429] sm:$0xf]
          %v891 = vld [vmem:[%s429 + $0x4] sm:$0xf]
          %v892 = vld [vmem:[%s429 + $0x8] sm:$0xf]
          %v893 = vld [vmem:[%s429 + $0xc] sm:$0xf]
          %v894 = vld [vmem:[%s429 + $0x10] sm:$0xf]
          %v895 = vld [vmem:[%s429 + $0x14] sm:$0xf]
          %v896 = vld [vmem:[%s429 + $0x18] sm:$0xf]
          %v897 = vld [vmem:[%s429 + $0x1c] sm:$0xf]
          %v898 = vld [vmem:[%s429 + $0x20] sm:$0xf]
          %v899 = vld [vmem:[%s429 + $0x24] sm:$0xf]
          %v900 = vld [vmem:[%s429 + $0x28] sm:$0xf]
          %v901 = vld [vmem:[%s429 + $0x2c] sm:$0xf]
          %v902 = vld [vmem:[%s429 + $0x30] sm:$0xf]
          %v903 = vld [vmem:[%s429 + $0x34] sm:$0xf]
          %v904 = vld [vmem:[%s429 + $0x38] sm:$0xf]
          %v905 = vld [vmem:[%s429 + $0x3c] sm:$0xf]
          %v922 = vunpack.c.l.b16 %v890
          %v923 = vunpack.c.l.b16 %v891
          %v924 = vunpack.c.l.b16 %v892
          %v925 = vunpack.c.l.b16 %v893
          %v926 = vunpack.c.l.b16 %v894
          %v927 = vunpack.c.l.b16 %v895
          %v928 = vunpack.c.l.b16 %v896
          %v929 = vunpack.c.l.b16 %v897
          %v930 = vunpack.c.l.b16 %v898
          %v931 = vunpack.c.l.b16 %v899
          %v932 = vunpack.c.l.b16 %v900
          %v933 = vunpack.c.l.b16 %v901
          %v934 = vunpack.c.l.b16 %v902
          %v935 = vunpack.c.l.b16 %v903
          %v936 = vunpack.c.l.b16 %v904
          %v937 = vunpack.c.l.b16 %v905
          %v938 = vpack.c.b16 %v923, %v922
          %v939 = vpack.c.b16 %v925, %v924
          %v940 = vpack.c.b16 %v927, %v926
          %v941 = vpack.c.b16 %v929, %v928
          %v942 = vpack.c.b16 %v931, %v930
          %v943 = vpack.c.b16 %v933, %v932
          %v944 = vpack.c.b16 %v935, %v934
          %v945 = vpack.c.b16 %v937, %v936
          %954 = vmatprep.subr.bf16.mxu0 0
          %955 = vmatpush1.bf16.msra.mxu0 %v945
          %956 = vmatprep.subr.bf16.mxu0 0
          %957 = vmatpush1.bf16.msra.mxu0 %v944
          %958 = vmatprep.subr.bf16.mxu0 0
          %959 = vmatpush1.bf16.msra.mxu0 %v943
          %960 = vmatprep.subr.bf16.mxu0 0
          %961 = vmatpush1.bf16.msra.mxu0 %v942
          %962 = vmatprep.subr.bf16.mxu0 0
          %963 = vmatpush1.bf16.msra.mxu0 %v941
          %964 = vmatprep.subr.bf16.mxu0 0
          %965 = vmatpush1.bf16.msra.mxu0 %v940
          %966 = vmatprep.subr.bf16.mxu0 0
          %967 = vmatpush1.bf16.msra.mxu0 %v939
          %968 = vmatprep.subr.bf16.mxu0 0
          %969 = vmatpush1.bf16.msra.mxu0 %v938
          %970 = vmatprep.subr.bf16.mxu0 0
          %971 = vmatpush2.bf16.msra.mxu0 0
          %972 = vmatprep.subr.bf16.mxu0 0
          %973 = vmatpush2.bf16.msra.mxu0 0
          %974 = vmatprep.subr.bf16.mxu0 0
          %975 = vmatpush2.bf16.msra.mxu0 0
          %976 = vmatprep.subr.bf16.mxu0 0
          %977 = vmatpush2.bf16.msra.mxu0 0
          %978 = vmatprep.subr.bf16.mxu0 0
          %979 = vmatpush2.bf16.msra.mxu0 0
          %980 = vmatprep.subr.bf16.mxu0 0
          %981 = vmatpush2.bf16.msra.mxu0 0
          %982 = vmatprep.subr.bf16.mxu0 0
          %983 = vmatpush2.bf16.msra.mxu0 0
          %984 = vmatprep.subr.bf16.mxu0 0
          %985 = vmatpush2.bf16.msra.mxu0 0
          %986 = vmatprep.mubr.bf16.mxu0 0
          %987 = vmatmul.mubr.bf16.gmra.mxu0 %v882
          %v988 = vpop.f32.mrf.mxu0
          %v989 = vadd.f32 0.0, %v988
          %v990 = vpop.f32.mrf.mxu0
          %v991 = vpop.f32.mrf.mxu0
          %v992 = vadd.f32 0.0, %v991
          %v993 = vpop.f32.mrf.mxu0
          %994 = vmatprep.mubr.bf16.mxu0 0
          %995 = vmatmul.mubr.bf16.gmra.mxu0 %v883
          %v996 = vpop.f32.mrf.mxu0
          %v997 = vadd.f32 0.0, %v996
          %v998 = vpop.f32.mrf.mxu0
          %v999 = vpop.f32.mrf.mxu0
          %v1000 = vadd.f32 0.0, %v999
          %v1001 = vpop.f32.mrf.mxu0
          %1002 = vmatprep.mubr.bf16.mxu0 0
          %1003 = vmatmul.mubr.bf16.gmra.mxu0 %v884
          %v1004 = vpop.f32.mrf.mxu0
          %v1005 = vadd.f32 0.0, %v1004
          %v1006 = vpop.f32.mrf.mxu0
          %v1007 = vpop.f32.mrf.mxu0
          %v1008 = vadd.f32 0.0, %v1007
          %v1009 = vpop.f32.mrf.mxu0
          %1010 = vmatprep.mubr.bf16.mxu0 0
          %1011 = vmatmul.mubr.bf16.gmra.mxu0 %v885
          %v1012 = vpop.f32.mrf.mxu0
          %v1013 = vadd.f32 0.0, %v1012
          %v1014 = vpop.f32.mrf.mxu0
          %v1015 = vpop.f32.mrf.mxu0
          %v1016 = vadd.f32 0.0, %v1015
          %v1017 = vpop.f32.mrf.mxu0
          %1018 = vmatprep.mubr.bf16.mxu0 0
          %1019 = vmatmul.mubr.bf16.gmra.mxu0 %v886
          %v1020 = vpop.f32.mrf.mxu0
          %v1021 = vadd.f32 0.0, %v1020
          %v1022 = vpop.f32.mrf.mxu0
          %v1023 = vpop.f32.mrf.mxu0
          %v1024 = vadd.f32 0.0, %v1023
          %v1025 = vpop.f32.mrf.mxu0
          %1026 = vmatprep.mubr.bf16.mxu0 0
          %1027 = vmatmul.mubr.bf16.gmra.mxu0 %v887
          %v1028 = vpop.f32.mrf.mxu0
          %v1029 = vadd.f32 0.0, %v1028
          %v1030 = vpop.f32.mrf.mxu0
          %v1031 = vpop.f32.mrf.mxu0
          %v1032 = vadd.f32 0.0, %v1031
          %v1033 = vpop.f32.mrf.mxu0
          %1034 = vmatprep.mubr.bf16.mxu0 0
          %1035 = vmatmul.mubr.bf16.gmra.mxu0 %v888
          %v1036 = vpop.f32.mrf.mxu0
          %v1037 = vadd.f32 0.0, %v1036
          %v1038 = vpop.f32.mrf.mxu0
          %v1039 = vpop.f32.mrf.mxu0
          %v1040 = vadd.f32 0.0, %v1039
          %v1041 = vpop.f32.mrf.mxu0
          %1042 = vmatprep.mubr.bf16.mxu0 0
          %1043 = vmatmul.mubr.bf16.gmra.mxu0 %v889
          %v1044 = vpop.f32.mrf.mxu0
          %v1045 = vadd.f32 0.0, %v1044
          %v1046 = vpop.f32.mrf.mxu0
          %v1047 = vpop.f32.mrf.mxu0
          %v1048 = vadd.f32 0.0, %v1047
          %v1049 = vpop.f32.mrf.mxu0
          %1050 = vdwg.mxu0
          %v1051 = vadd.f32 %v465, %v989
          %v1052 = vadd.f32 %v466, %v992
          %v1053 = vadd.f32 %v467, %v997
          %v1054 = vadd.f32 %v468, %v1000
          %v1055 = vadd.f32 %v469, %v1005
          %v1056 = vadd.f32 %v470, %v1008
          %v1057 = vadd.f32 %v471, %v1013
          %v1058 = vadd.f32 %v472, %v1016
          %v1059 = vadd.f32 %v473, %v1021
          %v1060 = vadd.f32 %v474, %v1024
          %v1061 = vadd.f32 %v475, %v1029
          %v1062 = vadd.f32 %v476, %v1032
          %v1063 = vadd.f32 %v477, %v1037
          %v1064 = vadd.f32 %v478, %v1040
          %v1065 = vadd.f32 %v479, %v1045
          %v1066 = vadd.f32 %v480, %v1048
          %1067 = vst [vmem:[#allocation2] sm:$0xff] %v1051
          %1068 = vst [vmem:[#allocation2 + $0x8] sm:$0xff] %v1052
          %1069 = vst [vmem:[#allocation2 + $0x10] sm:$0xff] %v1053
          %1070 = vst [vmem:[#allocation2 + $0x18] sm:$0xff] %v1054
          %1071 = vst [vmem:[#allocation2 + $0x20] sm:$0xff] %v1055
          %1072 = vst [vmem:[#allocation2 + $0x28] sm:$0xff] %v1056
          %1073 = vst [vmem:[#allocation2 + $0x30] sm:$0xff] %v1057
          %1074 = vst [vmem:[#allocation2 + $0x38] sm:$0xff] %v1058
          %1075 = vst [vmem:[#allocation2 + $0x40] sm:$0xff] %v1059
          %1076 = vst [vmem:[#allocation2 + $0x48] sm:$0xff] %v1060
          %1077 = vst [vmem:[#allocation2 + $0x50] sm:$0xff] %v1061
          %1078 = vst [vmem:[#allocation2 + $0x58] sm:$0xff] %v1062
          %1079 = vst [vmem:[#allocation2 + $0x60] sm:$0xff] %v1063
          %1080 = vst [vmem:[#allocation2 + $0x68] sm:$0xff] %v1064
          %1081 = vst [vmem:[#allocation2 + $0x70] sm:$0xff] %v1065
          %1082 = vst [vmem:[#allocation2 + $0x78] sm:$0xff] %v1066
        $region78: #{grouped_swiglu.1} parent=65 // pred_fallthru
          _
        %p1083 = scmp.eq.s32.totalorder %s54, 1
        %p1084 = pnand %p440, %p1083
        %p1085 = pneg %p1084
        // Predicated region
        $region79: #{grouped_swiglu.1} parent=65 // pred_check
          _
        $region80: #{grouped_swiglu.1} parent=65 // pred_check_branch
          %1087 = sbr.rel (%p1084) target = $region82
        $region81: #{grouped_swiglu.1} parent=65 // pred_region
          %v1088 = vld [vmem:[#allocation2] sm:$0xff]
          %v1089 = vld [vmem:[#allocation2 + $0x8] sm:$0xff]
          %v1090 = vld [vmem:[#allocation2 + $0x10] sm:$0xff]
          %v1091 = vld [vmem:[#allocation2 + $0x18] sm:$0xff]
          %v1092 = vld [vmem:[#allocation2 + $0x20] sm:$0xff]
          %v1093 = vld [vmem:[#allocation2 + $0x28] sm:$0xff]
          %v1094 = vld [vmem:[#allocation2 + $0x30] sm:$0xff]
          %v1095 = vld [vmem:[#allocation2 + $0x38] sm:$0xff]
          %v1096 = vld [vmem:[#allocation2 + $0x40] sm:$0xff]
          %v1097 = vld [vmem:[#allocation2 + $0x48] sm:$0xff]
          %v1098 = vld [vmem:[#allocation2 + $0x50] sm:$0xff]
          %v1099 = vld [vmem:[#allocation2 + $0x58] sm:$0xff]
          %v1100 = vld [vmem:[#allocation2 + $0x60] sm:$0xff]
          %v1101 = vld [vmem:[#allocation2 + $0x68] sm:$0xff]
          %v1102 = vld [vmem:[#allocation2 + $0x70] sm:$0xff]
          %v1103 = vld [vmem:[#allocation2 + $0x78] sm:$0xff]
          %v1104 = vlaneseq
          %v1105 = vshrl.u32 %v1104, 7
          %v1106 = vadd.s32 %v1105, 8
          %v1107 = vadd.s32 %v1105, 16
          %v1108 = vadd.s32 %v1105, 24
          %v1109 = vadd.s32 %v1105, 32
          %v1110 = vadd.s32 %v1105, 40
          %v1111 = vadd.s32 %v1105, 48
          %v1112 = vadd.s32 %v1105, 56
          %v1113 = vadd.s32 %v1105, 64
          %v1114 = vadd.s32 %v1105, 72
          %v1115 = vadd.s32 %v1105, 80
          %v1116 = vadd.s32 %v1105, 88
          %v1117 = vadd.s32 %v1105, 96
          %v1118 = vadd.s32 %v1105, 104
          %v1119 = vadd.s32 %v1105, 112
          %v1120 = vadd.s32 %v1105, 120
          %s1121 = sld [smem:[#allocation6 + %s53]]
          %v1122 = vstv %s1121
          %vm1123 = vcmp.ge.s32.totalorder %v1105, %v1122
          %vm1124 = vcmp.ge.s32.totalorder %v1106, %v1122
          %vm1125 = vcmp.ge.s32.totalorder %v1107, %v1122
          %vm1126 = vcmp.ge.s32.totalorder %v1108, %v1122
          %vm1127 = vcmp.ge.s32.totalorder %v1109, %v1122
          %vm1128 = vcmp.ge.s32.totalorder %v1110, %v1122
          %vm1129 = vcmp.ge.s32.totalorder %v1111, %v1122
          %vm1130 = vcmp.ge.s32.totalorder %v1112, %v1122
          %vm1131 = vcmp.ge.s32.totalorder %v1113, %v1122
          %vm1132 = vcmp.ge.s32.totalorder %v1114, %v1122
          %vm1133 = vcmp.ge.s32.totalorder %v1115, %v1122
          %vm1134 = vcmp.ge.s32.totalorder %v1116, %v1122
          %vm1135 = vcmp.ge.s32.totalorder %v1117, %v1122
          %vm1136 = vcmp.ge.s32.totalorder %v1118, %v1122
          %vm1137 = vcmp.ge.s32.totalorder %v1119, %v1122
          %vm1138 = vcmp.ge.s32.totalorder %v1120, %v1122
          %s1139 = sld [smem:[#allocation7 + %s53]]
          %v1140 = vstv %s1139
          %vm1141 = vcmp.lt.s32.totalorder %v1105, %v1140
          %vm1142 = vcmp.lt.s32.totalorder %v1106, %v1140
          %vm1143 = vcmp.lt.s32.totalorder %v1107, %v1140
          %vm1144 = vcmp.lt.s32.totalorder %v1108, %v1140
          %vm1145 = vcmp.lt.s32.totalorder %v1109, %v1140
          %vm1146 = vcmp.lt.s32.totalorder %v1110, %v1140
          %vm1147 = vcmp.lt.s32.totalorder %v1111, %v1140
          %vm1148 = vcmp.lt.s32.totalorder %v1112, %v1140
          %vm1149 = vcmp.lt.s32.totalorder %v1113, %v1140
          %vm1150 = vcmp.lt.s32.totalorder %v1114, %v1140
          %vm1151 = vcmp.lt.s32.totalorder %v1115, %v1140
          %vm1152 = vcmp.lt.s32.totalorder %v1116, %v1140
          %vm1153 = vcmp.lt.s32.totalorder %v1117, %v1140
          %vm1154 = vcmp.lt.s32.totalorder %v1118, %v1140
          %vm1155 = vcmp.lt.s32.totalorder %v1119, %v1140
          %vm1156 = vcmp.lt.s32.totalorder %v1120, %v1140
          %vm1157 = vmand %vm1123, %vm1141
          %vm1158 = vmand %vm1124, %vm1142
          %vm1159 = vmand %vm1125, %vm1143
          %vm1160 = vmand %vm1126, %vm1144
          %vm1161 = vmand %vm1127, %vm1145
          %vm1162 = vmand %vm1128, %vm1146
          %vm1163 = vmand %vm1129, %vm1147
          %vm1164 = vmand %vm1130, %vm1148
          %vm1165 = vmand %vm1131, %vm1149
          %vm1166 = vmand %vm1132, %vm1150
          %vm1167 = vmand %vm1133, %vm1151
          %vm1168 = vmand %vm1134, %vm1152
          %vm1169 = vmand %vm1135, %vm1153
          %vm1170 = vmand %vm1136, %vm1154
          %vm1171 = vmand %vm1137, %vm1155
          %vm1172 = vmand %vm1138, %vm1156
          %s1173 = sld [smem:[#allocation9 + %s53]]
          %p1174 = scmp.eq.s32.totalorder %s1173, 1
          %v1175 = vld [vmem:[%s401] sm:$0xff]
          %v1176 = vld [vmem:[%s401 + $0x8] sm:$0xff]
          %v1177 = vld [vmem:[%s401 + $0x10] sm:$0xff]
          %v1178 = vld [vmem:[%s401 + $0x18] sm:$0xff]
          %v1179 = vld [vmem:[%s401 + $0x20] sm:$0xff]
          %v1180 = vld [vmem:[%s401 + $0x28] sm:$0xff]
          %v1181 = vld [vmem:[%s401 + $0x30] sm:$0xff]
          %v1182 = vld [vmem:[%s401 + $0x38] sm:$0xff]
          %v1183 = vld [vmem:[%s401 + $0x40] sm:$0xff]
          %v1184 = vld [vmem:[%s401 + $0x48] sm:$0xff]
          %v1185 = vld [vmem:[%s401 + $0x50] sm:$0xff]
          %v1186 = vld [vmem:[%s401 + $0x58] sm:$0xff]
          %v1187 = vld [vmem:[%s401 + $0x60] sm:$0xff]
          %v1188 = vld [vmem:[%s401 + $0x68] sm:$0xff]
          %v1189 = vld [vmem:[%s401 + $0x70] sm:$0xff]
          %v1190 = vld [vmem:[%s401 + $0x78] sm:$0xff]
          %s1191 = scalar_select %p1174, 1, 0
          %v1192 = vstv %s1191
          %vm1193 = vcmp.eq.s32.totalorder %v1192, 1
          %v1194 = vsel %vm1193, 0.0, %v1175
          %v1195 = vsel %vm1193, 0.0, %v1176
          %v1196 = vsel %vm1193, 0.0, %v1177
          %v1197 = vsel %vm1193, 0.0, %v1178
          %v1198 = vsel %vm1193, 0.0, %v1179
          %v1199 = vsel %vm1193, 0.0, %v1180
          %v1200 = vsel %vm1193, 0.0, %v1181
          %v1201 = vsel %vm1193, 0.0, %v1182
          %v1202 = vsel %vm1193, 0.0, %v1183
          %v1203 = vsel %vm1193, 0.0, %v1184
          %v1204 = vsel %vm1193, 0.0, %v1185
          %v1205 = vsel %vm1193, 0.0, %v1186
          %v1206 = vsel %vm1193, 0.0, %v1187
          %v1207 = vsel %vm1193, 0.0, %v1188
          %v1208 = vsel %vm1193, 0.0, %v1189
          %v1209 = vsel %vm1193, 0.0, %v1190
          %v1210 = vsel %vm1157, 1, 0
          %v1211 = vsel %vm1158, 1, 0
          %v1212 = vsel %vm1159, 1, 0
          %v1213 = vsel %vm1160, 1, 0
          %v1214 = vsel %vm1161, 1, 0
          %v1215 = vsel %vm1162, 1, 0
          %v1216 = vsel %vm1163, 1, 0
          %v1217 = vsel %vm1164, 1, 0
          %v1218 = vsel %vm1165, 1, 0
          %v1219 = vsel %vm1166, 1, 0
          %v1220 = vsel %vm1167, 1, 0
          %v1221 = vsel %vm1168, 1, 0
          %v1222 = vsel %vm1169, 1, 0
          %v1223 = vsel %vm1170, 1, 0
          %v1224 = vsel %vm1171, 1, 0
          %v1225 = vsel %vm1172, 1, 0
          %vm1226 = vcmp.eq.s32.totalorder %v1210, 1
          %vm1227 = vcmp.eq.s32.totalorder %v1211, 1
          %vm1228 = vcmp.eq.s32.totalorder %v1212, 1
          %vm1229 = vcmp.eq.s32.totalorder %v1213, 1
          %vm1230 = vcmp.eq.s32.totalorder %v1214, 1
          %vm1231 = vcmp.eq.s32.totalorder %v1215, 1
          %vm1232 = vcmp.eq.s32.totalorder %v1216, 1
          %vm1233 = vcmp.eq.s32.totalorder %v1217, 1
          %vm1234 = vcmp.eq.s32.totalorder %v1218, 1
          %vm1235 = vcmp.eq.s32.totalorder %v1219, 1
          %vm1236 = vcmp.eq.s32.totalorder %v1220, 1
          %vm1237 = vcmp.eq.s32.totalorder %v1221, 1
          %vm1238 = vcmp.eq.s32.totalorder %v1222, 1
          %vm1239 = vcmp.eq.s32.totalorder %v1223, 1
          %vm1240 = vcmp.eq.s32.totalorder %v1224, 1
          %vm1241 = vcmp.eq.s32.totalorder %v1225, 1
          %v1242 = vsel %vm1226, %v1088, %v1194
          %v1243 = vsel %vm1227, %v1089, %v1195
          %v1244 = vsel %vm1228, %v1090, %v1196
          %v1245 = vsel %vm1229, %v1091, %v1197
          %v1246 = vsel %vm1230, %v1092, %v1198
          %v1247 = vsel %vm1231, %v1093, %v1199
          %v1248 = vsel %vm1232, %v1094, %v1200
          %v1249 = vsel %vm1233, %v1095, %v1201
          %v1250 = vsel %vm1234, %v1096, %v1202
          %v1251 = vsel %vm1235, %v1097, %v1203
          %v1252 = vsel %vm1236, %v1098, %v1204
          %v1253 = vsel %vm1237, %v1099, %v1205
          %v1254 = vsel %vm1238, %v1100, %v1206
          %v1255 = vsel %vm1239, %v1101, %v1207
          %v1256 = vsel %vm1240, %v1102, %v1208
          %v1257 = vsel %vm1241, %v1103, %v1209
          %1258 = vst [vmem:[%s401] sm:$0xff] %v1242
          %1259 = vst [vmem:[%s401 + $0x8] sm:$0xff] %v1243
          %1260 = vst [vmem:[%s401 + $0x10] sm:$0xff] %v1244
          %1261 = vst [vmem:[%s401 + $0x18] sm:$0xff] %v1245
          %1262 = vst [vmem:[%s401 + $0x20] sm:$0xff] %v1246
          %1263 = vst [vmem:[%s401 + $0x28] sm:$0xff] %v1247
          %1264 = vst [vmem:[%s401 + $0x30] sm:$0xff] %v1248
          %1265 = vst [vmem:[%s401 + $0x38] sm:$0xff] %v1249
          %1266 = vst [vmem:[%s401 + $0x40] sm:$0xff] %v1250
          %1267 = vst [vmem:[%s401 + $0x48] sm:$0xff] %v1251
          %1268 = vst [vmem:[%s401 + $0x50] sm:$0xff] %v1252
          %1269 = vst [vmem:[%s401 + $0x58] sm:$0xff] %v1253
          %1270 = vst [vmem:[%s401 + $0x60] sm:$0xff] %v1254
          %1271 = vst [vmem:[%s401 + $0x68] sm:$0xff] %v1255
          %1272 = vst [vmem:[%s401 + $0x70] sm:$0xff] %v1256
          %1273 = vst [vmem:[%s401 + $0x78] sm:$0xff] %v1257
        $region82: #{grouped_swiglu.1} parent=65 // pred_fallthru
          _
        %s1274 = sand.u32 %s175, 1
        %s1275 = scalar_lea.sflag [#allocation12], %s1274
        %s1276 = sand.u32 %s175, 1
        %s1277 = smul.addr %s1276, 128
        %s1278 = scalar_lea.vmem [#allocation11], %s1277
        // Predicated region
        $region83: #{grouped_swiglu.1} parent=65 // pred_check
          %p1279 = pneg %p185
        $region84: #{grouped_swiglu.1} parent=65 // pred_check_branch
          %1281 = sbr.rel (%p1279) target = $region86
        $region85: #{grouped_swiglu.1} parent=65 // pred_region
          %s1282 = sld [smem:[#allocation5 + %s53]]
          %s1283 = smul.u32 16, %s1282
          %s1285 = ssub.s32 2048, 2048
          %1286 = vsyncadd %s1275, %s1285
          %s1287 = smul.addr %s1283, 128
          %s1288 = scalar_lea.hbm %s9, %s1287
          %s1289 = sshll.u32 %s1278, 4
          %s1290 = int_to_ptr.vmem [resolvable:$true] %s1289
          %1295 = dma.vmem_to_hbm [thread:$0]  %s1290, 2048, %s1288, %s1275, 128, 128, 8
        $region86: #{grouped_swiglu.1} parent=65 // pred_fallthru
          _
      $region66: #{grouped_swiglu.1} parent=5 // pred_fallthru
        _
      %p1296 = scmp.le.s32.totalorder 2, %s44
      // Predicated region
      $region87: #{grouped_swiglu.1} parent=5 // pred_check
        %p1297 = pneg %p1296
      $region88: #{grouped_swiglu.1} parent=5 // pred_check_branch
        %1299 = sbr.rel (%p1297) target = $region90
      $region89: #{grouped_swiglu.1} parent=5 // pred_region
        %s1300 = ssub.s32 %s44, 2
        // Predicated region
        $region91: #{grouped_swiglu.1} parent=89 // pred_check
          %p1301 = pneg %p191
        $region92: #{grouped_swiglu.1} parent=89 // pred_check_branch
          %1303 = sbr.rel (%p1301) target = $region94
        $region93: #{grouped_swiglu.1} parent=89 // pred_region
          %s1304 = sand.u32 %s176, 1
          %s1305 = scalar_lea.sflag [#allocation12], %s1304
          %s1306 = sand.u32 %s176, 1
          %s1307 = smul.addr %s1306, 128
          %s1308 = scalar_lea.vmem [#allocation11], %s1307
          %1309 = dma.done %s1305, 2048
        $region94: #{grouped_swiglu.1} parent=89 // pred_fallthru
          _
      $region90: #{grouped_swiglu.1} parent=5 // pred_fallthru
        _
    $region6: #{grouped_swiglu.1} parent=1 // loop_footer
      %s48 = sadd.s32 1, %s44
    $region7: #{grouped_swiglu.1} parent=1 // loop_footer_branch
      %43 = sbr.rel target = $region3
    $region8: #{grouped_swiglu.1} parent=1 // loop_exit
      _
    %1310 = vsyncpa [#allocation12], 1
    %s1311 = scalar_lea.sflag [#allocation12], 1
    %1312 = vsyncpa %s1311, 1

</llo_original>
